<compile_context>
chip_gen: v7x
topology: tpu7x:2x2x1
jax: 0.10.0
libtpu: 0.0.40
codegen_flags: <defaults>
</compile_context>

<pallas_src>
import functools

import jax
import jax.numpy as jnp
from jax import lax
from jax.experimental import pallas as pl
from jax.experimental.pallas import tpu as pltpu


# Row offsets of each layer inside the packed (2072, 256) bf16 weight slab.
_W1_OFF = 0                     # 3 taps x (8, 256)    conv1 banded (192 real lanes)
_W2_OFF = _W1_OFF + 3 * 8       # 3 taps x (256, 256)  conv2 banded (192 real rows)
_WF1_OFF = _W2_OFF + 3 * 256    # 4 rows  x (256, 256) fc1 (128 real out cols)
_WF2_OFF = _WF1_OFF + 4 * 256   # (256, 256)           fc2 (128 real rows, nc cols)
_WSLAB_ROWS = _WF2_OFF + 256    # = 2072


# ----------------------------------------------------------------------------
# Fused kernel: conv1+ReLU -> conv2+ReLU -> flatten -> fc1+ReLU -> fc2
# ----------------------------------------------------------------------------
def _fused_cnn_kernel(x_ref, w_ref, b_ref, out_ref, h1_ref, h2_ref):
    f32, bf16 = jnp.float32, jnp.bfloat16
    B = out_ref.shape[0]
    R = 8 * B                       # active rows; x_ref / h1_ref carry +8 pad rows

    b1 = b_ref[0:1, :]              # (1,256) f32 conv1 bias (192 real)
    b2 = b_ref[1:2, :]              # (1,256) f32 conv2 bias
    bf1 = b_ref[2:3, :]             # (1,256) f32 fc1 bias (128 real)
    bf2 = b_ref[3:4, :]             # (1,256) f32 fc2 bias (num_classes real)

    # ---- conv1 + ReLU : (B*8, 8) -> (B*8, 256)  [lane = ow*32 + co, 192 real]
    # One matmul per kernel row over the WHOLE batch (M = B*8); window shifts
    # are row-offset loads from the zero-padded input, so tap outputs align.
    h1 = jnp.dot(x_ref[0:R, :], w_ref[_W1_OFF:_W1_OFF + 8, :],
                 preferred_element_type=f32)
    for i in (1, 2):
        h1 = h1 + jnp.dot(x_ref[i:i + R, :],
                          w_ref[_W1_OFF + 8 * i:_W1_OFF + 8 * (i + 1), :],
                          preferred_element_type=f32)
    h1 = jnp.maximum(h1 + b1, 0.0)              # f32 elementwise (v5e-safe)

    # Stash h1 as bf16 (cast hoisted: exactly once) with an 8-row zero tail so
    # conv2's shifted window loads stay in bounds.  Garbage rows (r%8 >= 6)
    # only ever feed rows that are discarded later.
    h1_ref[0:R, :] = h1.astype(bf16)
    h1_ref[R:R + 8, :] = jnp.zeros((8, 256), bf16)

    # ---- conv2 + ReLU : 3 taps merged into ONE K=768 matmul (MXU fill).
    # LHS = lane-concat of the three row-shifted windows (128-aligned blocks),
    # RHS = contiguous slab rows 24..792.
    lhs2 = jnp.concatenate([h1_ref[i:i + R, :] for i in range(3)], axis=1)
    h2 = jnp.dot(lhs2, w_ref[_W2_OFF:_W2_OFF + 3 * 256, :],
                 preferred_element_type=f32)
    h2 = jnp.maximum(h2 + b2, 0.0)              # (B*8, 256) [lane = ow*64 + co]

    # ---- flatten: B full-(8,256) unmasked tile stores into the bf16 scratch
    # (no masked (1,256) row stores, no 1024-wide buffer).  Rows 4..7 of each
    # sample are conv-shift garbage and are simply never read back.
    h2_bf = h2.astype(bf16)
    for b in range(B):                          # tiny & static; use a batch grid
        h2_ref[b] = h2_bf[8 * b:8 * (b + 1), :]  # axis instead when B grows

    # ---- fc1 + ReLU as an accumulation over the 4 spatial rows h:
    #      z1[b] = sum_h h2[b, h, :] @ WF1_h     (K = 4 x 256)
    z1 = None
    for h in range(4):
        t = jnp.dot(h2_ref[:, h, :],
                    w_ref[_WF1_OFF + 256 * h:_WF1_OFF + 256 * (h + 1), :],
                    preferred_element_type=f32)
        z1 = t if z1 is None else z1 + t
    a1 = jnp.maximum(z1 + bf1, 0.0)             # (B, 256) f32; lanes >=128 are 0
    # nn.Dropout(0.5) is identity in eval mode.
    # TODO(synk): training-mode dropout (pltpu.prng_random_bits mask) not implemented.

    # ---- fc2 -> lane-dense padded logits (B, 256); cols >= num_classes are
    # exactly zero and sliced off in the wrapper.
    out_ref[...] = jnp.dot(a1.astype(bf16),
                           w_ref[_WF2_OFF:_WF2_OFF + 256, :],
                           preferred_element_type=f32) + bf2


# ----------------------------------------------------------------------------
# Parameter preparation (ONCE at init; also how real torch weights would be
# imported: conv*: OIHW, fc*: (out, in)).  Everything is packed into 2 slabs.
# ----------------------------------------------------------------------------
def prepare_params(tp):
    f32, bf16 = jnp.float32, jnp.bfloat16

    # conv1 -> banded matrices, one (8, 192->256) block per kernel row i:
    #   W1_i[k, ow*32 + co] = conv1_w[co, 0, i, k - ow]  (0 <= k - ow < 3)
    w1_hwio = jnp.transpose(tp["conv1_w"], (2, 3, 1, 0))          # (3,3,1,32)
    w1t = jnp.zeros((3, 8, 6, 32), f32)
    for j in range(3):
        for w in range(6):
            w1t = w1t.at[:, w + j, w, :].set(w1_hwio[:, j, 0, :])
    w1t = jnp.pad(w1t.reshape(3, 8, 192), ((0, 0), (0, 0), (0, 64)))   # (3,8,256)

    # conv2 -> W2_i[w*32 + ci, ow*64 + co] = conv2_w[co, ci, i, w - ow]
    w2_hwio = jnp.transpose(tp["conv2_w"], (2, 3, 1, 0))          # (3,3,32,64)
    w2t = jnp.zeros((3, 6, 32, 4, 64), f32)
    for j in range(3):
        for ow in range(4):
            w2t = w2t.at[:, ow + j, :, ow, :].set(w2_hwio[:, j, :, :])
    w2t = jnp.pad(w2t.reshape(3, 192, 256), ((0, 0), (0, 64), (0, 0)))  # (3,256,256)

    # fc1: (out,in) -> (in,out); rows permuted from torch's NCHW flatten order
    # (c*16 + h*4 + w) to the kernel's (h, w*64 + c) order, chunked by spatial
    # row h, zero-padded to 256 output lanes.
    wf1 = tp["fc1_w"].T.reshape(64, 4, 4, 128)                    # (c, h, w, o)
    wf1 = jnp.transpose(wf1, (1, 2, 0, 3)).reshape(4, 256, 128)   # (h, w*64+c, o)
    wf1 = jnp.pad(wf1, ((0, 0), (0, 0), (0, 128)))                # (4,256,256)

    # fc2: (out,in) -> (in,out), zero-padded to (256, 256) for a lane-dense
    # padded-logits store.
    nc = tp["fc2_w"].shape[0]
    wf2 = jnp.zeros((256, 256), f32).at[:128, :nc].set(tp["fc2_w"].T)

    w_slab = jnp.concatenate(
        [w1t.reshape(24, 256), w2t.reshape(768, 256),
         wf1.reshape(1024, 256), wf2], axis=0).astype(bf16)
    assert w_slab.shape == (_WSLAB_ROWS, 256), w_slab.shape

    def _pad256(v):
        return jnp.pad(v, (0, 256 - v.shape[0]))

    b_slab = jnp.stack([_pad256(jnp.tile(tp["conv1_b"], 6)),      # lane = ow*32+co
                        _pad256(jnp.tile(tp["conv2_b"], 4)),      # lane = ow*64+co
                        _pad256(tp["fc1_b"]),
                        _pad256(tp["fc2_b"])]).astype(f32)        # (4, 256)

    return dict(w_slab=w_slab, b_slab=b_slab)


def init_torch_like_params(key, num_classes=9):
    ks = jax.random.split(key, 8)
    s, n = 0.05, jax.random.normal
    return dict(
        conv1_w=s * n(ks[0], (32, 1, 3, 3), jnp.float32),
        conv1_b=s * n(ks[1], (32,), jnp.float32),
        conv2_w=s * n(ks[2], (64, 32, 3, 3), jnp.float32),
        conv2_b=s * n(ks[3], (64,), jnp.float32),
        fc1_w=s * n(ks[4], (128, 64 * 4 * 4), jnp.float32),
        fc1_b=s * n(ks[5], (128,), jnp.float32),
        fc2_w=s * n(ks[6], (num_classes, 128), jnp.float32),
        fc2_b=s * n(ks[7], (num_classes,), jnp.float32),
    )


# ----------------------------------------------------------------------------
# Public forward
# ----------------------------------------------------------------------------
@functools.partial(jax.jit, static_argnames=("num_classes",))
def cnn_classifier_forward(params, x_nchw, num_classes=9):
    """x_nchw: (B, 1, 8, 8) float32 -> logits (B, num_classes) float32."""
    B = x_nchw.shape[0]
    assert x_nchw.shape[1:] == (1, 8, 8), x_nchw.shape
    # (B,1,8,8) -> (B*8, 8) rows (sample b at rows 8b..8b+7) with 8 zero pad
    # rows so the kernel's shifted conv-window loads stay in bounds; cast to
    # bf16 once here (MXU operand dtype) -- also halves the input DMA.
    x2d = jnp.pad(x_nchw.reshape(B * 8, 8).astype(jnp.bfloat16),
                  ((0, 8), (0, 0)))

    vmem = pl.BlockSpec(memory_space=pltpu.MemorySpace.VMEM)
    out_pad = pl.pallas_call(
        _fused_cnn_kernel,
        out_shape=jax.ShapeDtypeStruct((B, 256), jnp.float32),
        in_specs=[vmem, vmem, vmem],
        out_specs=vmem,
        scratch_shapes=[pltpu.VMEM((B * 8 + 8, 256), jnp.bfloat16),   # h1 (+pad)
                        pltpu.VMEM((B, 8, 256), jnp.bfloat16)],       # h2 rows
    )(x2d, params["w_slab"], params["b_slab"])
    return out_pad[:, :num_classes]          # drop lane padding outside the kernel


# ----------------------------------------------------------------------------
# Pure-JAX reference (mirrors the PyTorch module, eval mode) for a parity check
# ----------------------------------------------------------------------------
def reference_forward(tp, x_nchw):
    y = lax.conv_general_dilated(x_nchw, tp["conv1_w"], (1, 1), "VALID",
                                 dimension_numbers=("NCHW", "OIHW", "NCHW"))
    y = jnp.maximum(y + tp["conv1_b"][None, :, None, None], 0.0)
    y = lax.conv_general_dilated(y, tp["conv2_w"], (1, 1), "VALID",
                                 dimension_numbers=("NCHW", "OIHW", "NCHW"))
    y = jnp.maximum(y + tp["conv2_b"][None, :, None, None], 0.0)
    y = y.reshape(y.shape[0], -1)                        # NCHW flatten == .view
    y = jnp.maximum(y @ tp["fc1_w"].T + tp["fc1_b"], 0.0)
    return y @ tp["fc2_w"].T + tp["fc2_b"]


if __name__ == "__main__":
    key = jax.random.PRNGKey(0)
    pkey, xkey = jax.random.split(key)
    torch_params = init_torch_like_params(pkey, num_classes=9)
    params = prepare_params(torch_params)

    # batch=2, channels=1, spatial=8 (implied by the 64*4*4 flatten)
    x = jax.random.normal(xkey, (2, 1, 8, 8), jnp.float32)

    logits = cnn_classifier_forward(params, x, num_classes=9)
    logits = jax.block_until_ready(logits)
    assert logits.shape == (2, 9), logits.shape
    assert logits.dtype == jnp.float32

    ref = reference_forward(torch_params, x)
    err = float(jnp.max(jnp.abs(logits - ref)))
    assert err < 3e-2, f"mismatch vs f32 reference: max abs err {err}"

    print("KERNEL_OK")
</pallas_src>

<mosaic_0001>
module attributes {stable_mosaic.version = 11 : i64} {
  func.func @_fused_cnn_kernel(%arg0: memref<24x8xbf16, #tpu.memory_space<vmem>>, %arg1: memref<2072x256xbf16, #tpu.memory_space<vmem>>, %arg2: memref<4x256xf32, #tpu.memory_space<vmem>>, %arg3: memref<2x256xf32, #tpu.memory_space<vmem>>, %arg4: memref<24x256xbf16, #tpu.memory_space<vmem>>, %arg5: memref<2x8x256xbf16, #tpu.memory_space<vmem>>) attributes {dimension_semantics = [], scalar_prefetch = 0 : i64, scratch_operands = 2 : i64, tpu.core_type = #tpu.core_type<tc>} {
    %c0 = arith.constant 0 : index
    %c0_0 = arith.constant 0 : index
    %0 = vector.load %arg2[%c0, %c0_0] : memref<4x256xf32, #tpu.memory_space<vmem>>, vector<1x256xf32>
    %c1 = arith.constant 1 : index
    %c0_1 = arith.constant 0 : index
    %1 = vector.load %arg2[%c1, %c0_1] : memref<4x256xf32, #tpu.memory_space<vmem>>, vector<1x256xf32>
    %c2 = arith.constant 2 : index
    %c0_2 = arith.constant 0 : index
    %2 = vector.load %arg2[%c2, %c0_2] : memref<4x256xf32, #tpu.memory_space<vmem>>, vector<1x256xf32>
    %c3 = arith.constant 3 : index
    %c0_3 = arith.constant 0 : index
    %3 = vector.load %arg2[%c3, %c0_3] : memref<4x256xf32, #tpu.memory_space<vmem>>, vector<1x256xf32>
    %c0_4 = arith.constant 0 : index
    %c0_5 = arith.constant 0 : index
    %4 = vector.load %arg0[%c0_4, %c0_5] : memref<24x8xbf16, #tpu.memory_space<vmem>>, vector<16x8xbf16>
    %c0_6 = arith.constant 0 : index
    %c0_7 = arith.constant 0 : index
    %5 = vector.load %arg1[%c0_6, %c0_7] : memref<2072x256xbf16, #tpu.memory_space<vmem>>, vector<8x256xbf16>
    %cst = arith.constant dense<0.000000e+00> : vector<16x256xf32>
    %6 = tpu.matmul %4, %5, %cst {dimension_numbers = #tpu.dot_dimension_numbers<[1], [0], [0], [1], [0, 0, 1, 1], [], []>} : vector<16x8xbf16>, vector<8x256xbf16>, vector<16x256xf32> -> vector<16x256xf32>
    %c1_8 = arith.constant 1 : index
    %c0_9 = arith.constant 0 : index
    %7 = vector.load %arg0[%c1_8, %c0_9] : memref<24x8xbf16, #tpu.memory_space<vmem>>, vector<16x8xbf16>
    %c8 = arith.constant 8 : index
    %c0_10 = arith.constant 0 : index
    %8 = vector.load %arg1[%c8, %c0_10] : memref<2072x256xbf16, #tpu.memory_space<vmem>>, vector<8x256xbf16>
    %cst_11 = arith.constant dense<0.000000e+00> : vector<16x256xf32>
    %9 = tpu.matmul %7, %8, %cst_11 {dimension_numbers = #tpu.dot_dimension_numbers<[1], [0], [0], [1], [0, 0, 1, 1], [], []>} : vector<16x8xbf16>, vector<8x256xbf16>, vector<16x256xf32> -> vector<16x256xf32>
    %10 = arith.addf %6, %9 : vector<16x256xf32>
    %c2_12 = arith.constant 2 : index
    %c0_13 = arith.constant 0 : index
    %11 = vector.load %arg0[%c2_12, %c0_13] : memref<24x8xbf16, #tpu.memory_space<vmem>>, vector<16x8xbf16>
    %c16 = arith.constant 16 : index
    %c0_14 = arith.constant 0 : index
    %12 = vector.load %arg1[%c16, %c0_14] : memref<2072x256xbf16, #tpu.memory_space<vmem>>, vector<8x256xbf16>
    %cst_15 = arith.constant dense<0.000000e+00> : vector<16x256xf32>
    %13 = tpu.matmul %11, %12, %cst_15 {dimension_numbers = #tpu.dot_dimension_numbers<[1], [0], [0], [1], [0, 0, 1, 1], [], []>} : vector<16x8xbf16>, vector<8x256xbf16>, vector<16x256xf32> -> vector<16x256xf32>
    %14 = arith.addf %10, %13 : vector<16x256xf32>
    %15 = vector.broadcast %0 : vector<1x256xf32> to vector<16x256xf32>
    %16 = arith.addf %14, %15 : vector<16x256xf32>
    %cst_16 = arith.constant 0.000000e+00 : f32
    %17 = vector.broadcast %cst_16 : f32 to vector<16x256xf32>
    %18 = arith.maximumf %16, %17 : vector<16x256xf32>
    %19 = arith.truncf %18 : vector<16x256xf32> to vector<16x256xbf16>
    %c0_17 = arith.constant 0 : index
    %c0_18 = arith.constant 0 : index
    %20 = vector.load %arg4[%c0_17, %c0_18] : memref<24x256xbf16, #tpu.memory_space<vmem>>, vector<16x256xbf16>
    tpu.vector_store %arg4[%c0_17, %c0_18], %19 {strides = array<i32>} : memref<24x256xbf16, #tpu.memory_space<vmem>>, vector<16x256xbf16>,
    %cst_19 = arith.constant 0.000000e+00 : bf16
    %21 = vector.broadcast %cst_19 : bf16 to vector<8x256xbf16>
    %c16_20 = arith.constant 16 : index
    %c0_21 = arith.constant 0 : index
    %22 = vector.load %arg4[%c16_20, %c0_21] : memref<24x256xbf16, #tpu.memory_space<vmem>>, vector<8x256xbf16>
    tpu.vector_store %arg4[%c16_20, %c0_21], %21 {strides = array<i32>} : memref<24x256xbf16, #tpu.memory_space<vmem>>, vector<8x256xbf16>,
    %c0_22 = arith.constant 0 : index
    %c0_23 = arith.constant 0 : index
    %23 = vector.load %arg4[%c0_22, %c0_23] : memref<24x256xbf16, #tpu.memory_space<vmem>>, vector<16x256xbf16>
    %c1_24 = arith.constant 1 : index
    %c0_25 = arith.constant 0 : index
    %24 = vector.load %arg4[%c1_24, %c0_25] : memref<24x256xbf16, #tpu.memory_space<vmem>>, vector<16x256xbf16>
    %c2_26 = arith.constant 2 : index
    %c0_27 = arith.constant 0 : index
    %25 = vector.load %arg4[%c2_26, %c0_27] : memref<24x256xbf16, #tpu.memory_space<vmem>>, vector<16x256xbf16>
    %26 = tpu.concatenate %23, %24, %25 in 1 : vector<16x256xbf16>, vector<16x256xbf16>, vector<16x256xbf16> -> vector<16x768xbf16>
    %c24 = arith.constant 24 : index
    %c0_28 = arith.constant 0 : index
    %27 = vector.load %arg1[%c24, %c0_28] : memref<2072x256xbf16, #tpu.memory_space<vmem>>, vector<768x256xbf16>
    %cst_29 = arith.constant dense<0.000000e+00> : vector<16x256xf32>
    %28 = tpu.matmul %26, %27, %cst_29 {dimension_numbers = #tpu.dot_dimension_numbers<[1], [0], [0], [1], [0, 0, 1, 1], [], []>} : vector<16x768xbf16>, vector<768x256xbf16>, vector<16x256xf32> -> vector<16x256xf32>
    %29 = vector.broadcast %1 : vector<1x256xf32> to vector<16x256xf32>
    %30 = arith.addf %28, %29 : vector<16x256xf32>
    %cst_30 = arith.constant 0.000000e+00 : f32
    %31 = vector.broadcast %cst_30 : f32 to vector<16x256xf32>
    %32 = arith.maximumf %30, %31 : vector<16x256xf32>
    %33 = arith.truncf %32 : vector<16x256xf32> to vector<16x256xbf16>
    %34 = vector.extract_strided_slice %33 {offsets = [0, 0], sizes = [8, 256], strides = [1, 1]} : vector<16x256xbf16> to vector<8x256xbf16>
    %c0_31 = arith.constant 0 : index
    %c0_32 = arith.constant 0 : index
    %c0_33 = arith.constant 0 : index
    %35 = vector.load %arg5[%c0_31, %c0_32, %c0_33] : memref<2x8x256xbf16, #tpu.memory_space<vmem>>, vector<1x8x256xbf16>
    %36 = vector.shape_cast %35 : vector<1x8x256xbf16> to vector<8x256xbf16>
    %37 = vector.shape_cast %34 : vector<8x256xbf16> to vector<1x8x256xbf16>
    tpu.vector_store %arg5[%c0_31, %c0_32, %c0_33], %37 {strides = array<i32>} : memref<2x8x256xbf16, #tpu.memory_space<vmem>>, vector<1x8x256xbf16>,
    %38 = vector.extract_strided_slice %33 {offsets = [8, 0], sizes = [8, 256], strides = [1, 1]} : vector<16x256xbf16> to vector<8x256xbf16>
    %c1_34 = arith.constant 1 : index
    %c0_35 = arith.constant 0 : index
    %c0_36 = arith.constant 0 : index
    %39 = vector.load %arg5[%c1_34, %c0_35, %c0_36] : memref<2x8x256xbf16, #tpu.memory_space<vmem>>, vector<1x8x256xbf16>
    %40 = vector.shape_cast %39 : vector<1x8x256xbf16> to vector<8x256xbf16>
    %41 = vector.shape_cast %38 : vector<8x256xbf16> to vector<1x8x256xbf16>
    tpu.vector_store %arg5[%c1_34, %c0_35, %c0_36], %41 {strides = array<i32>} : memref<2x8x256xbf16, #tpu.memory_space<vmem>>, vector<1x8x256xbf16>,
    %c0_37 = arith.constant 0 : index
    %c0_38 = arith.constant 0 : index
    %c0_39 = arith.constant 0 : index
    %42 = vector.load %arg5[%c0_37, %c0_38, %c0_39] : memref<2x8x256xbf16, #tpu.memory_space<vmem>>, vector<2x1x256xbf16>
    %43 = vector.shape_cast %42 : vector<2x1x256xbf16> to vector<2x256xbf16>
    %c792 = arith.constant 792 : index
    %c0_40 = arith.constant 0 : index
    %44 = vector.load %arg1[%c792, %c0_40] : memref<2072x256xbf16, #tpu.memory_space<vmem>>, vector<256x256xbf16>
    %cst_41 = arith.constant dense<0.000000e+00> : vector<2x256xf32>
    %45 = tpu.matmul %43, %44, %cst_41 {dimension_numbers = #tpu.dot_dimension_numbers<[1], [0], [0], [1], [0, 0, 1, 1], [], []>} : vector<2x256xbf16>, vector<256x256xbf16>, vector<2x256xf32> -> vector<2x256xf32>
    %c0_42 = arith.constant 0 : index
    %c1_43 = arith.constant 1 : index
    %c0_44 = arith.constant 0 : index
    %46 = vector.load %arg5[%c0_42, %c1_43, %c0_44] : memref<2x8x256xbf16, #tpu.memory_space<vmem>>, vector<2x1x256xbf16>
    %47 = vector.shape_cast %46 : vector<2x1x256xbf16> to vector<2x256xbf16>
    %c1048 = arith.constant 1048 : index
    %c0_45 = arith.constant 0 : index
    %48 = vector.load %arg1[%c1048, %c0_45] : memref<2072x256xbf16, #tpu.memory_space<vmem>>, vector<256x256xbf16>
    %cst_46 = arith.constant dense<0.000000e+00> : vector<2x256xf32>
    %49 = tpu.matmul %47, %48, %cst_46 {dimension_numbers = #tpu.dot_dimension_numbers<[1], [0], [0], [1], [0, 0, 1, 1], [], []>} : vector<2x256xbf16>, vector<256x256xbf16>, vector<2x256xf32> -> vector<2x256xf32>
    %50 = arith.addf %45, %49 : vector<2x256xf32>
    %c0_47 = arith.constant 0 : index
    %c2_48 = arith.constant 2 : index
    %c0_49 = arith.constant 0 : index
    %51 = vector.load %arg5[%c0_47, %c2_48, %c0_49] : memref<2x8x256xbf16, #tpu.memory_space<vmem>>, vector<2x1x256xbf16>
    %52 = vector.shape_cast %51 : vector<2x1x256xbf16> to vector<2x256xbf16>
    %c1304 = arith.constant 1304 : index
    %c0_50 = arith.constant 0 : index
    %53 = vector.load %arg1[%c1304, %c0_50] : memref<2072x256xbf16, #tpu.memory_space<vmem>>, vector<256x256xbf16>
    %cst_51 = arith.constant dense<0.000000e+00> : vector<2x256xf32>
    %54 = tpu.matmul %52, %53, %cst_51 {dimension_numbers = #tpu.dot_dimension_numbers<[1], [0], [0], [1], [0, 0, 1, 1], [], []>} : vector<2x256xbf16>, vector<256x256xbf16>, vector<2x256xf32> -> vector<2x256xf32>
    %55 = arith.addf %50, %54 : vector<2x256xf32>
    %c0_52 = arith.constant 0 : index
    %c3_53 = arith.constant 3 : index
    %c0_54 = arith.constant 0 : index
    %56 = vector.load %arg5[%c0_52, %c3_53, %c0_54] : memref<2x8x256xbf16, #tpu.memory_space<vmem>>, vector<2x1x256xbf16>
    %57 = vector.shape_cast %56 : vector<2x1x256xbf16> to vector<2x256xbf16>
    %c1560 = arith.constant 1560 : index
    %c0_55 = arith.constant 0 : index
    %58 = vector.load %arg1[%c1560, %c0_55] : memref<2072x256xbf16, #tpu.memory_space<vmem>>, vector<256x256xbf16>
    %cst_56 = arith.constant dense<0.000000e+00> : vector<2x256xf32>
    %59 = tpu.matmul %57, %58, %cst_56 {dimension_numbers = #tpu.dot_dimension_numbers<[1], [0], [0], [1], [0, 0, 1, 1], [], []>} : vector<2x256xbf16>, vector<256x256xbf16>, vector<2x256xf32> -> vector<2x256xf32>
    %60 = arith.addf %55, %59 : vector<2x256xf32>
    %61 = vector.broadcast %2 : vector<1x256xf32> to vector<2x256xf32>
    %62 = arith.addf %60, %61 : vector<2x256xf32>
    %cst_57 = arith.constant 0.000000e+00 : f32
    %63 = vector.broadcast %cst_57 : f32 to vector<2x256xf32>
    %64 = arith.maximumf %62, %63 : vector<2x256xf32>
    %65 = arith.truncf %64 : vector<2x256xf32> to vector<2x256xbf16>
    %c1816 = arith.constant 1816 : index
    %c0_58 = arith.constant 0 : index
    %66 = vector.load %arg1[%c1816, %c0_58] : memref<2072x256xbf16, #tpu.memory_space<vmem>>, vector<256x256xbf16>
    %cst_59 = arith.constant dense<0.000000e+00> : vector<2x256xf32>
    %67 = tpu.matmul %65, %66, %cst_59 {dimension_numbers = #tpu.dot_dimension_numbers<[1], [0], [0], [1], [0, 0, 1, 1], [], []>} : vector<2x256xbf16>, vector<256x256xbf16>, vector<2x256xf32> -> vector<2x256xf32>
    %68 = vector.broadcast %3 : vector<1x256xf32> to vector<2x256xf32>
    %69 = arith.addf %67, %68 : vector<2x256xf32>
    %c0_60 = arith.constant 0 : index
    %c0_61 = arith.constant 0 : index
    %70 = vector.load %arg3[%c0_60, %c0_61] : memref<2x256xf32, #tpu.memory_space<vmem>>, vector<2x256xf32>
    tpu.vector_store %arg3[%c0_60, %c0_61], %69 {strides = array<i32>} : memref<2x256xf32, #tpu.memory_space<vmem>>, vector<2x256xf32>,
    return
  }
}

</mosaic_0001>

<llo_original>
// kernel: cnn_classifier_forward.1
$region0: #{cnn_classifier_forward.1}
  #allocation0 [shape = 'u32[]', space=smem, size = 0x4, offset = 0x4, fixed_abs, tag = 'smem constant byte address 0x4 - core index']
  #allocation1 [shape = 'u32[144,128]{1,0:T(1,128)}', space=vmem, size = 0x12000, scoped, tag = 'internal scratch']
  #allocation2 [shape = 'bf16[24,256]{1,0:T(8,128)(2,1)}', space=vmem, size = 0x3000, scoped, tag = 'scratch operand']
  #allocation3 [shape = 'bf16[2,8,256]{2,1,0:T(8,128)(2,1)}', space=vmem, size = 0x2000, scoped, tag = 'scratch operand']
  %s0 = inlined_call_operand.vmem [shape: bf16[24,8], index: 0, kind: input, shape index: {}]
  %s1 = inlined_call_operand.hbm [shape: bf16[2072,256], index: 1, kind: input, shape index: {}]
  %s2 = inlined_call_operand.hbm [shape: f32[4,256], index: 2, kind: input, shape index: {}]
  %s3 = inlined_call_operand.vmem [shape: f32[2,256], index: 3, kind: output, shape index: {}]
  %s4 = sld [smem:[#allocation0]]
  $region30: #{cnn_classifier_forward.1} parent=0
    _
  %s6 = ssub.s32 1, %s4
  %s7 = scalar_select 0, %s6, %s4
  $region1: #{cnn_classifier_forward.1} parent=0
    #allocation4 [shape = 'u8[1060864]{0}', space=vmem, size = 0x103000, scoped, tag = 'input window, operand 1, single buffered']
    #allocation5 [shape = 's32[1]{0}', space=sflag, size = 0x4, scoped, tag = 'scoped memory for cnn_classifier_forward.1']
    #allocation6 [shape = 'u8[4096]{0}', space=vmem, size = 0x1000, scoped, tag = 'input window, operand 2, single buffered']
    #allocation7 [shape = 's32[1]{0}', space=sflag, size = 0x4, scoped, tag = 'scoped memory for cnn_classifier_forward.1']
    %8 = vsyncpa [#allocation5], 0
    %9 = vsyncpa [#allocation7], 0
    // Predicated region
    $region2: #{cnn_classifier_forward.1} parent=1 // pred_check
      _
    $region3: #{cnn_classifier_forward.1} parent=1 // pred_check_branch
      %11 = sbr.rel (0) target = $region5
    $region4: #{cnn_classifier_forward.1} parent=1 // pred_region
      _
    $region5: #{cnn_classifier_forward.1} parent=1 // pred_fallthru
      _
    // Predicated region
    $region6: #{cnn_classifier_forward.1} parent=1 // pred_check
      _
    $region7: #{cnn_classifier_forward.1} parent=1 // pred_check_branch
      %13 = sbr.rel (0) target = $region9
    $region8: #{cnn_classifier_forward.1} parent=1 // pred_region
      %s15 = ssub.s32 33152, 33152
      %16 = vsyncadd [#allocation5], %s15
      %s17 = sshll.u32 [#allocation4], 4
      %s18 = int_to_ptr.vmem [resolvable:$true] %s17
      %23 = dma.hbm_to_vmem [thread:$0]  %s1, 33152, %s18, [#allocation5], 128, 128, 8
    $region9: #{cnn_classifier_forward.1} parent=1 // pred_fallthru
      _
    // Predicated region
    $region10: #{cnn_classifier_forward.1} parent=1 // pred_check
      _
    $region11: #{cnn_classifier_forward.1} parent=1 // pred_check_branch
      %25 = sbr.rel (0) target = $region13
    $region12: #{cnn_classifier_forward.1} parent=1 // pred_region
      %s27 = ssub.s32 128, 128
      %28 = vsyncadd [#allocation7], %s27
      %s30 = sshll.u32 [#allocation6], 4
      %s31 = int_to_ptr.vmem [resolvable:$true] %s30
      %33 = dma.hbm_to_vmem [thread:$0]  %s2, 128, %s31, [#allocation7]
    $region13: #{cnn_classifier_forward.1} parent=1 // pred_fallthru
      _
    // Predicated region
    $region14: #{cnn_classifier_forward.1} parent=1 // pred_check
      _
    $region15: #{cnn_classifier_forward.1} parent=1 // pred_check_branch
      %35 = sbr.rel (0) target = $region17
    $region16: #{cnn_classifier_forward.1} parent=1 // pred_region
      %36 = dma.done [#allocation5], 33152
    $region17: #{cnn_classifier_forward.1} parent=1 // pred_fallthru
      _
    // Predicated region
    $region18: #{cnn_classifier_forward.1} parent=1 // pred_check
      _
    $region19: #{cnn_classifier_forward.1} parent=1 // pred_check_branch
      %38 = sbr.rel (0) target = $region21
    $region20: #{cnn_classifier_forward.1} parent=1 // pred_region
      %39 = dma.done [#allocation7], 128
    $region21: #{cnn_classifier_forward.1} parent=1 // pred_fallthru
      _
    %v41 = vld [vmem:[#allocation6] ss:$4 sm:$0x3]
    %s42 = scalar_lea.vmem [#allocation6], 1
    %v43 = vld [vmem:[%s42] ss:$4 sm:$0x3]
    %s44 = scalar_lea.vmem [#allocation6], 2
    %v45 = vld [vmem:[%s44] ss:$4 sm:$0x3]
    %s46 = scalar_lea.vmem [#allocation6], 3
    %v47 = vld [vmem:[%s46] ss:$4 sm:$0x3]
    %v48 = vld [vmem:[%s0] sm:$0xf]
    %v49 = vld [vmem:[%s0 + $0x4] sm:$0xf]
    %v50 = vld [vmem:[#allocation4] sm:$0xff]
    %v51 = vld [vmem:[%s0 + $0x8] sm:$0x1]
    %v52 = vld [vmem:[#allocation4 + $0x8] sm:$0xff]
    %v56 = vunpack.c.l.b16 %v48
    %v57 = vunpack.c.l.b16 %v49
    %v58 = vunpack.c.l.b16 %v51
    %v59 = vpack.c.b16 %v57, %v56
    %v60 = vpack.c.b16 %v58, %v58
    %vm61 = vsmask.f32 7424
    %v63 = vshrl.u32 %v59, 16
    %v65 = vshll.u32 %v59, 16
    %v67 = vrot.slane %v65, 1
    %v68 = vor.u32 %v63, %v67
    %v70 = vshll.u32 %v60, 16
    %v72 = vrot.slane %v70, 1
    %v73 = vsel %vm61, %v68, %v72
    %v75 = vunpack.c.l.b16 %v52
    %v76 = vunpack.c.h.b16 %v52
    %v77 = vpack.c.b16 %v75, %v75
    %v78 = vpack.c.b16 %v76, %v76
    %vm79 = vcmask 64512
    %v81 = vsel %vm79, %v73, 0
    %vm83 = vcmask 1043456
    %v85 = vsel %vm83, %v77, 0
    %v88 = vsel %vm83, %v78, 0
    %90 = vmatprep.subr.bf16.mxu0 %v88
    %91 = vmatpush1.bf16.msra.mxu0 %v85
    %92 = vmatprep.subr.bf16.mxu0 0
    %93 = vmatpush1.bf16.msra.mxu0 0
    %94 = vmatprep.subr.bf16.mxu0 0
    %95 = vmatpush1.bf16.msra.mxu0 0
    %96 = vmatprep.subr.bf16.mxu0 0
    %97 = vmatpush1.bf16.msra.mxu0 0
    %98 = vmatprep.subr.bf16.mxu0 0
    %99 = vmatpush1.bf16.msra.mxu0 0
    %100 = vmatprep.subr.bf16.mxu0 0
    %101 = vmatpush1.bf16.msra.mxu0 0
    %102 = vmatprep.subr.bf16.mxu0 0
    %103 = vmatpush1.bf16.msra.mxu0 0
    %104 = vmatprep.subr.bf16.mxu0 0
    %105 = vmatpush1.bf16.msra.mxu0 0
    %106 = vmatprep.subr.bf16.mxu0 0
    %107 = vmatpush1.bf16.msra.mxu0 0
    %108 = vmatprep.subr.bf16.mxu0 0
    %109 = vmatpush1.bf16.msra.mxu0 0
    %110 = vmatprep.subr.bf16.mxu0 0
    %111 = vmatpush1.bf16.msra.mxu0 0
    %112 = vmatprep.subr.bf16.mxu0 0
    %113 = vmatpush1.bf16.msra.mxu0 0
    %114 = vmatprep.subr.bf16.mxu0 0
    %115 = vmatpush1.bf16.msra.mxu0 0
    %116 = vmatprep.subr.bf16.mxu0 0
    %117 = vmatpush1.bf16.msra.mxu0 0
    %118 = vmatprep.subr.bf16.mxu0 0
    %119 = vmatpush1.bf16.msra.mxu0 0
    %120 = vmatprep.subr.bf16.mxu0 0
    %121 = vmatpush1.bf16.msra.mxu0 0
    %122 = vmatprep.mubr.bf16.mxu0 0
    %123 = vmatmul.mubr.bf16.gmra.mrb[0].mxu0 %v81
    %v124 = vpop.f32.mrb[0].mxu0
    %v125 = vadd.f32 0.0, %v124
    %v126 = vpop.f32.mrb[0].mxu0
    %v127 = vadd.f32 0.0, %v126
    %v128 = vpop.f32.mrb[0].mxu0
    %v129 = vadd.f32 0.0, %v128
    %v130 = vpop.f32.mrb[0].mxu0
    %v131 = vadd.f32 0.0, %v130
    %132 = vdwg.mxu0
    %v134 = vunpack.c.l.b16 %v50
    %v135 = vunpack.c.h.b16 %v50
    %v136 = vpack.c.b16 %v134, %v134
    %v137 = vpack.c.b16 %v135, %v135
    %v138 = vsel %vm79, %v59, 0
    %v141 = vsel %vm83, %v136, 0
    %v144 = vsel %vm83, %v137, 0
    %146 = vmatprep.subr.bf16.mxu0 %v144
    %147 = vmatpush1.bf16.msra.mxu0 %v141
    %148 = vmatprep.subr.bf16.mxu0 0
    %149 = vmatpush1.bf16.msra.mxu0 0
    %150 = vmatprep.subr.bf16.mxu0 0
    %151 = vmatpush1.bf16.msra.mxu0 0
    %152 = vmatprep.subr.bf16.mxu0 0
    %153 = vmatpush1.bf16.msra.mxu0 0
    %154 = vmatprep.subr.bf16.mxu0 0
    %155 = vmatpush1.bf16.msra.mxu0 0
    %156 = vmatprep.subr.bf16.mxu0 0
    %157 = vmatpush1.bf16.msra.mxu0 0
    %158 = vmatprep.subr.bf16.mxu0 0
    %159 = vmatpush1.bf16.msra.mxu0 0
    %160 = vmatprep.subr.bf16.mxu0 0
    %161 = vmatpush1.bf16.msra.mxu0 0
    %162 = vmatprep.subr.bf16.mxu0 0
    %163 = vmatpush1.bf16.msra.mxu0 0
    %164 = vmatprep.subr.bf16.mxu0 0
    %165 = vmatpush1.bf16.msra.mxu0 0
    %166 = vmatprep.subr.bf16.mxu0 0
    %167 = vmatpush1.bf16.msra.mxu0 0
    %168 = vmatprep.subr.bf16.mxu0 0
    %169 = vmatpush1.bf16.msra.mxu0 0
    %170 = vmatprep.subr.bf16.mxu0 0
    %171 = vmatpush1.bf16.msra.mxu0 0
    %172 = vmatprep.subr.bf16.mxu0 0
    %173 = vmatpush1.bf16.msra.mxu0 0
    %174 = vmatprep.subr.bf16.mxu0 0
    %175 = vmatpush1.bf16.msra.mxu0 0
    %176 = vmatprep.subr.bf16.mxu0 0
    %177 = vmatpush1.bf16.msra.mxu0 0
    %178 = vmatprep.mubr.bf16.mxu0 0
    %179 = vmatmul.mubr.bf16.gmra.mrb[0].mxu0 %v138
    %v180 = vpop.f32.mrb[0].mxu0
    %v181 = vadd.f32 %v125, %v180
    %v182 = vpop.f32.mrb[0].mxu0
    %v183 = vadd.f32 %v127, %v182
    %v184 = vpop.f32.mrb[0].mxu0
    %v185 = vadd.f32 %v129, %v184
    %v186 = vpop.f32.mrb[0].mxu0
    %v187 = vadd.f32 %v131, %v186
    %188 = vdwg.mxu0
    %v189 = vld [vmem:[%s0] sm:$0xe]
    %v190 = vld [vmem:[#allocation4 + $0x10] sm:$0xff]
    %v192 = vunpack.c.l.b16 %v189
    %v193 = vpack.c.b16 %v57, %v192
    %vm194 = vcmask 1046528
    %v195 = vrot.slane %v193, 1
    %v196 = vrot.slane %v60, 1
    %v197 = vsel %vm194, %v195, %v196
    %v199 = vunpack.c.l.b16 %v190
    %v200 = vunpack.c.h.b16 %v190
    %v201 = vpack.c.b16 %v199, %v199
    %v202 = vpack.c.b16 %v200, %v200
    %v204 = vsel %vm79, %v197, 0
    %v207 = vsel %vm83, %v201, 0
    %v210 = vsel %vm83, %v202, 0
    %212 = vmatprep.subr.bf16.mxu0 %v210
    %213 = vmatpush1.bf16.msra.mxu0 %v207
    %214 = vmatprep.subr.bf16.mxu0 0
    %215 = vmatpush1.bf16.msra.mxu0 0
    %216 = vmatprep.subr.bf16.mxu0 0
    %217 = vmatpush1.bf16.msra.mxu0 0
    %218 = vmatprep.subr.bf16.mxu0 0
    %219 = vmatpush1.bf16.msra.mxu0 0
    %220 = vmatprep.subr.bf16.mxu0 0
    %221 = vmatpush1.bf16.msra.mxu0 0
    %222 = vmatprep.subr.bf16.mxu0 0
    %223 = vmatpush1.bf16.msra.mxu0 0
    %224 = vmatprep.subr.bf16.mxu0 0
    %225 = vmatpush1.bf16.msra.mxu0 0
    %226 = vmatprep.subr.bf16.mxu0 0
    %227 = vmatpush1.bf16.msra.mxu0 0
    %228 = vmatprep.subr.bf16.mxu0 0
    %229 = vmatpush1.bf16.msra.mxu0 0
    %230 = vmatprep.subr.bf16.mxu0 0
    %231 = vmatpush1.bf16.msra.mxu0 0
    %232 = vmatprep.subr.bf16.mxu0 0
    %233 = vmatpush1.bf16.msra.mxu0 0
    %234 = vmatprep.subr.bf16.mxu0 0
    %235 = vmatpush1.bf16.msra.mxu0 0
    %236 = vmatprep.subr.bf16.mxu0 0
    %237 = vmatpush1.bf16.msra.mxu0 0
    %238 = vmatprep.subr.bf16.mxu0 0
    %239 = vmatpush1.bf16.msra.mxu0 0
    %240 = vmatprep.subr.bf16.mxu0 0
    %241 = vmatpush1.bf16.msra.mxu0 0
    %242 = vmatprep.subr.bf16.mxu0 0
    %243 = vmatpush1.bf16.msra.mxu0 0
    %244 = vmatprep.mubr.bf16.mxu0 0
    %245 = vmatmul.mubr.bf16.gmra.mrb[0].mxu0 %v204
    %v246 = vpop.f32.mrb[0].mxu0
    %v247 = vadd.f32 0.0, %v246
    %v248 = vpop.f32.mrb[0].mxu0
    %v249 = vadd.f32 0.0, %v248
    %v250 = vpop.f32.mrb[0].mxu0
    %v251 = vadd.f32 0.0, %v250
    %v252 = vpop.f32.mrb[0].mxu0
    %v253 = vadd.f32 0.0, %v252
    %254 = vdwg.mxu0
    %v255 = vadd.f32 %v181, %v247
    %v256 = vadd.f32 %v183, %v249
    %v257 = vadd.f32 %v185, %v251
    %v258 = vadd.f32 %v187, %v253
    %v260 = vlaneseq
    %v261 = vshrl.u32 %v260, 7
    %v262 = vsub.s32 0, %v261
    %v263 = vrot.slane %v41, %v262
    %v264 = vlaneseq
    %v265 = vshrl.u32 %v264, 7
    %v266 = vsub.s32 1, %v265
    %v267 = vrot.slane %v41, %v266
    %v270 = vadd.f32 %v255, %v263
    %v271 = vadd.f32 %v256, %v267
    %v272 = vadd.f32 %v257, %v263
    %v273 = vadd.f32 %v258, %v267
    %v274 = vmax.f32 %v270, 0.0
    %v275 = vmax.f32 %v271, 0.0
    %v276 = vmax.f32 %v272, 0.0
    %v277 = vmax.f32 %v273, 0.0
    %v278 = vpack.c.bf16 %v276, %v274
    %v279 = vpack.c.bf16 %v277, %v275
    %v282 = vunpack.c.l.b16 %v278
    %v283 = vunpack.c.l.b16 %v279
    %v284 = vunpack.c.h.b16 %v278
    %v285 = vunpack.c.h.b16 %v279
    %v286 = vpack.c.b16 %v283, %v282
    %v287 = vpack.c.b16 %v285, %v284
    %290 = vst [vmem:[#allocation2] sm:$0xff] %v286
    %291 = vst [vmem:[#allocation2 + $0x8] sm:$0xff] %v287
    %292 = vst [vmem:[#allocation2 + $0x10] sm:$0xff] 0
    %v293 = vld [vmem:[#allocation2] sm:$0xff]
    %v294 = vld [vmem:[#allocation2 + $0x8] sm:$0xff]
    %v295 = vld [vmem:[#allocation2] sm:$0xff]
    %v296 = vld [vmem:[#allocation2 + $0x8] sm:$0xff]
    %v297 = vld [vmem:[#allocation2 + $0x10] sm:$0x11]
    %v298 = vld [vmem:[#allocation2] sm:$0xee]
    %v301 = vunpack.c.l.b16 %v293
    %v302 = vunpack.c.h.b16 %v293
    %v303 = vunpack.c.l.b16 %v294
    %v304 = vunpack.c.h.b16 %v294
    %v305 = vpack.c.b16 %v303, %v301
    %v306 = vpack.c.b16 %v304, %v302
    %v312 = vunpack.c.l.b16 %v295
    %v313 = vunpack.c.h.b16 %v295
    %v314 = vunpack.c.l.b16 %v296
    %v315 = vunpack.c.h.b16 %v296
    %v316 = vunpack.c.l.b16 %v297
    %v317 = vunpack.c.h.b16 %v297
    %v318 = vpack.c.b16 %v314, %v312
    %v319 = vpack.c.b16 %v315, %v313
    %v320 = vpack.c.b16 %v316, %v316
    %v321 = vpack.c.b16 %v317, %v317
    %v323 = vshrl.u32 %v318, 16
    %v325 = vshll.u32 %v318, 16
    %v327 = vrot.slane %v325, 1
    %v328 = vor.u32 %v323, %v327
    %v330 = vshll.u32 %v320, 16
    %v332 = vrot.slane %v330, 1
    %v333 = vsel %vm61, %v328, %v332
    %v335 = vshrl.u32 %v319, 16
    %v337 = vshll.u32 %v319, 16
    %v339 = vrot.slane %v337, 1
    %v340 = vor.u32 %v335, %v339
    %v342 = vshll.u32 %v321, 16
    %v344 = vrot.slane %v342, 1
    %v345 = vsel %vm61, %v340, %v344
    %v349 = vunpack.c.l.b16 %v298
    %v350 = vunpack.c.h.b16 %v298
    %v351 = vpack.c.b16 %v314, %v349
    %v352 = vpack.c.b16 %v315, %v350
    %v353 = vrot.slane %v351, 1
    %v354 = vrot.slane %v320, 1
    %v355 = vsel %vm194, %v353, %v354
    %v356 = vrot.slane %v352, 1
    %v357 = vrot.slane %v321, 1
    %v358 = vsel %vm194, %v356, %v357
    %v361 = vld [vmem:[#allocation4 + $0x18] sm:$0xff]
    %v362 = vld [vmem:[#allocation4 + $0x20] sm:$0xff]
    %v363 = vld [vmem:[#allocation4 + $0x28] sm:$0xff]
    %v364 = vld [vmem:[#allocation4 + $0x30] sm:$0xff]
    %v365 = vld [vmem:[#allocation4 + $0x38] sm:$0xff]
    %v366 = vld [vmem:[#allocation4 + $0x40] sm:$0xff]
    %v367 = vld [vmem:[#allocation4 + $0x48] sm:$0xff]
    %v368 = vld [vmem:[#allocation4 + $0x50] sm:$0xff]
    %v369 = vld [vmem:[#allocation4 + $0x58] sm:$0xff]
    %v370 = vld [vmem:[#allocation4 + $0x60] sm:$0xff]
    %v371 = vld [vmem:[#allocation4 + $0x68] sm:$0xff]
    %v372 = vld [vmem:[#allocation4 + $0x70] sm:$0xff]
    %v373 = vld [vmem:[#allocation4 + $0x78] sm:$0xff]
    %v374 = vld [vmem:[#allocation4 + $0x80] sm:$0xff]
    %v375 = vld [vmem:[#allocation4 + $0x88] sm:$0xff]
    %v376 = vld [vmem:[#allocation4 + $0x90] sm:$0xff]
    %v377 = vld [vmem:[#allocation4 + $0x98] sm:$0xff]
    %v378 = vld [vmem:[#allocation4 + $0xa0] sm:$0xff]
    %v379 = vld [vmem:[#allocation4 + $0xa8] sm:$0xff]
    %v380 = vld [vmem:[#allocation4 + $0xb0] sm:$0xff]
    %v381 = vld [vmem:[#allocation4 + $0xb8] sm:$0xff]
    %v382 = vld [vmem:[#allocation4 + $0xc0] sm:$0xff]
    %v383 = vld [vmem:[#allocation4 + $0xc8] sm:$0xff]
    %v384 = vld [vmem:[#allocation4 + $0xd0] sm:$0xff]
    %v385 = vld [vmem:[#allocation4 + $0xd8] sm:$0xff]
    %v386 = vld [vmem:[#allocation4 + $0xe0] sm:$0xff]
    %v387 = vld [vmem:[#allocation4 + $0xe8] sm:$0xff]
    %v388 = vld [vmem:[#allocation4 + $0xf0] sm:$0xff]
    %v389 = vld [vmem:[#allocation4 + $0xf8] sm:$0xff]
    %v390 = vld [vmem:[#allocation4 + $0x100] sm:$0xff]
    %v391 = vld [vmem:[#allocation4 + $0x108] sm:$0xff]
    %v392 = vld [vmem:[#allocation4 + $0x110] sm:$0xff]
    %v393 = vld [vmem:[#allocation4 + $0x118] sm:$0xff]
    %v394 = vld [vmem:[#allocation4 + $0x120] sm:$0xff]
    %v395 = vld [vmem:[#allocation4 + $0x128] sm:$0xff]
    %v396 = vld [vmem:[#allocation4 + $0x130] sm:$0xff]
    %v397 = vld [vmem:[#allocation4 + $0x138] sm:$0xff]
    %v398 = vld [vmem:[#allocation4 + $0x140] sm:$0xff]
    %v399 = vld [vmem:[#allocation4 + $0x148] sm:$0xff]
    %v400 = vld [vmem:[#allocation4 + $0x150] sm:$0xff]
    %v401 = vld [vmem:[#allocation4 + $0x158] sm:$0xff]
    %v402 = vld [vmem:[#allocation4 + $0x160] sm:$0xff]
    %v403 = vld [vmem:[#allocation4 + $0x168] sm:$0xff]
    %v404 = vld [vmem:[#allocation4 + $0x170] sm:$0xff]
    %v405 = vld [vmem:[#allocation4 + $0x178] sm:$0xff]
    %v406 = vld [vmem:[#allocation4 + $0x180] sm:$0xff]
    %v407 = vld [vmem:[#allocation4 + $0x188] sm:$0xff]
    %v408 = vld [vmem:[#allocation4 + $0x190] sm:$0xff]
    %v409 = vld [vmem:[#allocation4 + $0x198] sm:$0xff]
    %v410 = vld [vmem:[#allocation4 + $0x1a0] sm:$0xff]
    %v411 = vld [vmem:[#allocation4 + $0x1a8] sm:$0xff]
    %v412 = vld [vmem:[#allocation4 + $0x1b0] sm:$0xff]
    %v413 = vld [vmem:[#allocation4 + $0x1b8] sm:$0xff]
    %v414 = vld [vmem:[#allocation4 + $0x1c0] sm:$0xff]
    %v415 = vld [vmem:[#allocation4 + $0x1c8] sm:$0xff]
    %v416 = vld [vmem:[#allocation4 + $0x1d0] sm:$0xff]
    %v417 = vld [vmem:[#allocation4 + $0x1d8] sm:$0xff]
    %v418 = vld [vmem:[#allocation4 + $0x1e0] sm:$0xff]
    %v419 = vld [vmem:[#allocation4 + $0x1e8] sm:$0xff]
    %v420 = vld [vmem:[#allocation4 + $0x1f0] sm:$0xff]
    %v421 = vld [vmem:[#allocation4 + $0x1f8] sm:$0xff]
    %v422 = vld [vmem:[#allocation4 + $0x200] sm:$0xff]
    %v423 = vld [vmem:[#allocation4 + $0x208] sm:$0xff]
    %v424 = vld [vmem:[#allocation4 + $0x210] sm:$0xff]
    %v425 = vld [vmem:[#allocation4 + $0x218] sm:$0xff]
    %v426 = vld [vmem:[#allocation4 + $0x220] sm:$0xff]
    %v427 = vld [vmem:[#allocation4 + $0x228] sm:$0xff]
    %v428 = vld [vmem:[#allocation4 + $0x230] sm:$0xff]
    %v429 = vld [vmem:[#allocation4 + $0x238] sm:$0xff]
    %v430 = vld [vmem:[#allocation4 + $0x240] sm:$0xff]
    %v431 = vld [vmem:[#allocation4 + $0x248] sm:$0xff]
    %v432 = vld [vmem:[#allocation4 + $0x250] sm:$0xff]
    %v433 = vld [vmem:[#allocation4 + $0x258] sm:$0xff]
    %v434 = vld [vmem:[#allocation4 + $0x260] sm:$0xff]
    %v435 = vld [vmem:[#allocation4 + $0x268] sm:$0xff]
    %v436 = vld [vmem:[#allocation4 + $0x270] sm:$0xff]
    %v437 = vld [vmem:[#allocation4 + $0x278] sm:$0xff]
    %v438 = vld [vmem:[#allocation4 + $0x280] sm:$0xff]
    %v439 = vld [vmem:[#allocation4 + $0x288] sm:$0xff]
    %v440 = vld [vmem:[#allocation4 + $0x290] sm:$0xff]
    %v441 = vld [vmem:[#allocation4 + $0x298] sm:$0xff]
    %v442 = vld [vmem:[#allocation4 + $0x2a0] sm:$0xff]
    %v443 = vld [vmem:[#allocation4 + $0x2a8] sm:$0xff]
    %v444 = vld [vmem:[#allocation4 + $0x2b0] sm:$0xff]
    %v445 = vld [vmem:[#allocation4 + $0x2b8] sm:$0xff]
    %v446 = vld [vmem:[#allocation4 + $0x2c0] sm:$0xff]
    %v447 = vld [vmem:[#allocation4 + $0x2c8] sm:$0xff]
    %v448 = vld [vmem:[#allocation4 + $0x2d0] sm:$0xff]
    %v449 = vld [vmem:[#allocation4 + $0x2d8] sm:$0xff]
    %v450 = vld [vmem:[#allocation4 + $0x2e0] sm:$0xff]
    %v451 = vld [vmem:[#allocation4 + $0x2e8] sm:$0xff]
    %v452 = vld [vmem:[#allocation4 + $0x2f0] sm:$0xff]
    %v453 = vld [vmem:[#allocation4 + $0x2f8] sm:$0xff]
    %v454 = vld [vmem:[#allocation4 + $0x300] sm:$0xff]
    %v455 = vld [vmem:[#allocation4 + $0x308] sm:$0xff]
    %v456 = vld [vmem:[#allocation4 + $0x310] sm:$0xff]
    %v458 = vlaneseq
    %v459 = vshrl.u32 %v458, 7
    %v460 = vsub.s32 0, %v459
    %v461 = vrot.slane %v43, %v460
    %v462 = vlaneseq
    %v463 = vshrl.u32 %v462, 7
    %v464 = vsub.s32 1, %v463
    %v465 = vrot.slane %v43, %v464
    %v564 = vunpack.c.l.b16 %v361
    %v565 = vunpack.c.h.b16 %v361
    %v566 = vunpack.c.l.b16 %v362
    %v567 = vunpack.c.h.b16 %v362
    %v568 = vunpack.c.l.b16 %v363
    %v569 = vunpack.c.h.b16 %v363
    %v570 = vunpack.c.l.b16 %v364
    %v571 = vunpack.c.h.b16 %v364
    %v572 = vunpack.c.l.b16 %v365
    %v573 = vunpack.c.h.b16 %v365
    %v574 = vunpack.c.l.b16 %v366
    %v575 = vunpack.c.h.b16 %v366
    %v576 = vunpack.c.l.b16 %v367
    %v577 = vunpack.c.h.b16 %v367
    %v578 = vunpack.c.l.b16 %v368
    %v579 = vunpack.c.h.b16 %v368
    %v580 = vunpack.c.l.b16 %v369
    %v581 = vunpack.c.h.b16 %v369
    %v582 = vunpack.c.l.b16 %v370
    %v583 = vunpack.c.h.b16 %v370
    %v584 = vunpack.c.l.b16 %v371
    %v585 = vunpack.c.h.b16 %v371
    %v586 = vunpack.c.l.b16 %v372
    %v587 = vunpack.c.h.b16 %v372
    %v588 = vunpack.c.l.b16 %v373
    %v589 = vunpack.c.h.b16 %v373
    %v590 = vunpack.c.l.b16 %v374
    %v591 = vunpack.c.h.b16 %v374
    %v592 = vunpack.c.l.b16 %v375
    %v593 = vunpack.c.h.b16 %v375
    %v594 = vunpack.c.l.b16 %v376
    %v595 = vunpack.c.h.b16 %v376
    %v596 = vunpack.c.l.b16 %v377
    %v597 = vunpack.c.h.b16 %v377
    %v598 = vunpack.c.l.b16 %v378
    %v599 = vunpack.c.h.b16 %v378
    %v600 = vunpack.c.l.b16 %v379
    %v601 = vunpack.c.h.b16 %v379
    %v602 = vunpack.c.l.b16 %v380
    %v603 = vunpack.c.h.b16 %v380
    %v604 = vunpack.c.l.b16 %v381
    %v605 = vunpack.c.h.b16 %v381
    %v606 = vunpack.c.l.b16 %v382
    %v607 = vunpack.c.h.b16 %v382
    %v608 = vunpack.c.l.b16 %v383
    %v609 = vunpack.c.h.b16 %v383
    %v610 = vunpack.c.l.b16 %v384
    %v611 = vunpack.c.h.b16 %v384
    %v612 = vunpack.c.l.b16 %v385
    %v613 = vunpack.c.h.b16 %v385
    %v614 = vunpack.c.l.b16 %v386
    %v615 = vunpack.c.h.b16 %v386
    %v616 = vunpack.c.l.b16 %v387
    %v617 = vunpack.c.h.b16 %v387
    %v618 = vunpack.c.l.b16 %v388
    %v619 = vunpack.c.h.b16 %v388
    %v620 = vunpack.c.l.b16 %v389
    %v621 = vunpack.c.h.b16 %v389
    %v622 = vunpack.c.l.b16 %v390
    %v623 = vunpack.c.h.b16 %v390
    %v624 = vunpack.c.l.b16 %v391
    %v625 = vunpack.c.h.b16 %v391
    %v626 = vunpack.c.l.b16 %v392
    %v627 = vunpack.c.h.b16 %v392
    %v628 = vunpack.c.l.b16 %v393
    %v629 = vunpack.c.h.b16 %v393
    %v630 = vunpack.c.l.b16 %v394
    %v631 = vunpack.c.h.b16 %v394
    %v632 = vunpack.c.l.b16 %v395
    %v633 = vunpack.c.h.b16 %v395
    %v634 = vunpack.c.l.b16 %v396
    %v635 = vunpack.c.h.b16 %v396
    %v636 = vunpack.c.l.b16 %v397
    %v637 = vunpack.c.h.b16 %v397
    %v638 = vunpack.c.l.b16 %v398
    %v639 = vunpack.c.h.b16 %v398
    %v640 = vunpack.c.l.b16 %v399
    %v641 = vunpack.c.h.b16 %v399
    %v642 = vunpack.c.l.b16 %v400
    %v643 = vunpack.c.h.b16 %v400
    %v644 = vunpack.c.l.b16 %v401
    %v645 = vunpack.c.h.b16 %v401
    %v646 = vunpack.c.l.b16 %v402
    %v647 = vunpack.c.h.b16 %v402
    %v648 = vunpack.c.l.b16 %v403
    %v649 = vunpack.c.h.b16 %v403
    %v650 = vunpack.c.l.b16 %v404
    %v651 = vunpack.c.h.b16 %v404
    %v652 = vunpack.c.l.b16 %v405
    %v653 = vunpack.c.h.b16 %v405
    %v654 = vunpack.c.l.b16 %v406
    %v655 = vunpack.c.h.b16 %v406
    %v656 = vunpack.c.l.b16 %v407
    %v657 = vunpack.c.h.b16 %v407
    %v658 = vunpack.c.l.b16 %v408
    %v659 = vunpack.c.h.b16 %v408
    %v660 = vunpack.c.l.b16 %v409
    %v661 = vunpack.c.h.b16 %v409
    %v662 = vunpack.c.l.b16 %v410
    %v663 = vunpack.c.h.b16 %v410
    %v664 = vunpack.c.l.b16 %v411
    %v665 = vunpack.c.h.b16 %v411
    %v666 = vunpack.c.l.b16 %v412
    %v667 = vunpack.c.h.b16 %v412
    %v668 = vunpack.c.l.b16 %v413
    %v669 = vunpack.c.h.b16 %v413
    %v670 = vunpack.c.l.b16 %v414
    %v671 = vunpack.c.h.b16 %v414
    %v672 = vunpack.c.l.b16 %v415
    %v673 = vunpack.c.h.b16 %v415
    %v674 = vunpack.c.l.b16 %v416
    %v675 = vunpack.c.h.b16 %v416
    %v676 = vunpack.c.l.b16 %v417
    %v677 = vunpack.c.h.b16 %v417
    %v678 = vunpack.c.l.b16 %v418
    %v679 = vunpack.c.h.b16 %v418
    %v680 = vunpack.c.l.b16 %v419
    %v681 = vunpack.c.h.b16 %v419
    %v682 = vunpack.c.l.b16 %v420
    %v683 = vunpack.c.h.b16 %v420
    %v684 = vunpack.c.l.b16 %v421
    %v685 = vunpack.c.h.b16 %v421
    %v686 = vunpack.c.l.b16 %v422
    %v687 = vunpack.c.h.b16 %v422
    %v688 = vunpack.c.l.b16 %v423
    %v689 = vunpack.c.h.b16 %v423
    %v690 = vunpack.c.l.b16 %v424
    %v691 = vunpack.c.h.b16 %v424
    %v692 = vunpack.c.l.b16 %v425
    %v693 = vunpack.c.h.b16 %v425
    %v694 = vunpack.c.l.b16 %v426
    %v695 = vunpack.c.h.b16 %v426
    %v696 = vunpack.c.l.b16 %v427
    %v697 = vunpack.c.h.b16 %v427
    %v698 = vunpack.c.l.b16 %v428
    %v699 = vunpack.c.h.b16 %v428
    %v700 = vunpack.c.l.b16 %v429
    %v701 = vunpack.c.h.b16 %v429
    %v702 = vunpack.c.l.b16 %v430
    %v703 = vunpack.c.h.b16 %v430
    %v704 = vunpack.c.l.b16 %v431
    %v705 = vunpack.c.h.b16 %v431
    %v706 = vunpack.c.l.b16 %v432
    %v707 = vunpack.c.h.b16 %v432
    %v708 = vunpack.c.l.b16 %v433
    %v709 = vunpack.c.h.b16 %v433
    %v710 = vunpack.c.l.b16 %v434
    %v711 = vunpack.c.h.b16 %v434
    %v712 = vunpack.c.l.b16 %v435
    %v713 = vunpack.c.h.b16 %v435
    %v714 = vunpack.c.l.b16 %v436
    %v715 = vunpack.c.h.b16 %v436
    %v716 = vunpack.c.l.b16 %v437
    %v717 = vunpack.c.h.b16 %v437
    %v718 = vunpack.c.l.b16 %v438
    %v719 = vunpack.c.h.b16 %v438
    %v720 = vunpack.c.l.b16 %v439
    %v721 = vunpack.c.h.b16 %v439
    %v722 = vunpack.c.l.b16 %v440
    %v723 = vunpack.c.h.b16 %v440
    %v724 = vunpack.c.l.b16 %v441
    %v725 = vunpack.c.h.b16 %v441
    %v726 = vunpack.c.l.b16 %v442
    %v727 = vunpack.c.h.b16 %v442
    %v728 = vunpack.c.l.b16 %v443
    %v729 = vunpack.c.h.b16 %v443
    %v730 = vunpack.c.l.b16 %v444
    %v731 = vunpack.c.h.b16 %v444
    %v732 = vunpack.c.l.b16 %v445
    %v733 = vunpack.c.h.b16 %v445
    %v734 = vunpack.c.l.b16 %v446
    %v735 = vunpack.c.h.b16 %v446
    %v736 = vunpack.c.l.b16 %v447
    %v737 = vunpack.c.h.b16 %v447
    %v738 = vunpack.c.l.b16 %v448
    %v739 = vunpack.c.h.b16 %v448
    %v740 = vunpack.c.l.b16 %v449
    %v741 = vunpack.c.h.b16 %v449
    %v742 = vunpack.c.l.b16 %v450
    %v743 = vunpack.c.h.b16 %v450
    %v744 = vunpack.c.l.b16 %v451
    %v745 = vunpack.c.h.b16 %v451
    %v746 = vunpack.c.l.b16 %v452
    %v747 = vunpack.c.h.b16 %v452
    %v748 = vunpack.c.l.b16 %v453
    %v749 = vunpack.c.h.b16 %v453
    %v750 = vunpack.c.l.b16 %v454
    %v751 = vunpack.c.h.b16 %v454
    %v752 = vunpack.c.l.b16 %v455
    %v753 = vunpack.c.h.b16 %v455
    %v754 = vunpack.c.l.b16 %v456
    %v755 = vunpack.c.h.b16 %v456
    %v756 = vpack.c.b16 %v566, %v564
    %v757 = vpack.c.b16 %v567, %v565
    %v758 = vpack.c.b16 %v570, %v568
    %v759 = vpack.c.b16 %v571, %v569
    %v760 = vpack.c.b16 %v574, %v572
    %v761 = vpack.c.b16 %v575, %v573
    %v762 = vpack.c.b16 %v578, %v576
    %v763 = vpack.c.b16 %v579, %v577
    %v764 = vpack.c.b16 %v582, %v580
    %v765 = vpack.c.b16 %v583, %v581
    %v766 = vpack.c.b16 %v586, %v584
    %v767 = vpack.c.b16 %v587, %v585
    %v768 = vpack.c.b16 %v590, %v588
    %v769 = vpack.c.b16 %v591, %v589
    %v770 = vpack.c.b16 %v594, %v592
    %v771 = vpack.c.b16 %v595, %v593
    %v772 = vpack.c.b16 %v598, %v596
    %v773 = vpack.c.b16 %v599, %v597
    %v774 = vpack.c.b16 %v602, %v600
    %v775 = vpack.c.b16 %v603, %v601
    %v776 = vpack.c.b16 %v606, %v604
    %v777 = vpack.c.b16 %v607, %v605
    %v778 = vpack.c.b16 %v610, %v608
    %v779 = vpack.c.b16 %v611, %v609
    %v780 = vpack.c.b16 %v614, %v612
    %v781 = vpack.c.b16 %v615, %v613
    %v782 = vpack.c.b16 %v618, %v616
    %v783 = vpack.c.b16 %v619, %v617
    %v784 = vpack.c.b16 %v622, %v620
    %v785 = vpack.c.b16 %v623, %v621
    %v786 = vpack.c.b16 %v626, %v624
    %v787 = vpack.c.b16 %v627, %v625
    %v788 = vpack.c.b16 %v630, %v628
    %v789 = vpack.c.b16 %v631, %v629
    %v790 = vpack.c.b16 %v634, %v632
    %v791 = vpack.c.b16 %v635, %v633
    %v792 = vpack.c.b16 %v638, %v636
    %v793 = vpack.c.b16 %v639, %v637
    %v794 = vpack.c.b16 %v642, %v640
    %v795 = vpack.c.b16 %v643, %v641
    %v796 = vpack.c.b16 %v646, %v644
    %v797 = vpack.c.b16 %v647, %v645
    %v798 = vpack.c.b16 %v650, %v648
    %v799 = vpack.c.b16 %v651, %v649
    %v800 = vpack.c.b16 %v654, %v652
    %v801 = vpack.c.b16 %v655, %v653
    %v802 = vpack.c.b16 %v658, %v656
    %v803 = vpack.c.b16 %v659, %v657
    %v804 = vpack.c.b16 %v662, %v660
    %v805 = vpack.c.b16 %v663, %v661
    %v806 = vpack.c.b16 %v666, %v664
    %v807 = vpack.c.b16 %v667, %v665
    %v808 = vpack.c.b16 %v670, %v668
    %v809 = vpack.c.b16 %v671, %v669
    %v810 = vpack.c.b16 %v674, %v672
    %v811 = vpack.c.b16 %v675, %v673
    %v812 = vpack.c.b16 %v678, %v676
    %v813 = vpack.c.b16 %v679, %v677
    %v814 = vpack.c.b16 %v682, %v680
    %v815 = vpack.c.b16 %v683, %v681
    %v816 = vpack.c.b16 %v686, %v684
    %v817 = vpack.c.b16 %v687, %v685
    %v818 = vpack.c.b16 %v690, %v688
    %v819 = vpack.c.b16 %v691, %v689
    %v820 = vpack.c.b16 %v694, %v692
    %v821 = vpack.c.b16 %v695, %v693
    %v822 = vpack.c.b16 %v698, %v696
    %v823 = vpack.c.b16 %v699, %v697
    %v824 = vpack.c.b16 %v702, %v700
    %v825 = vpack.c.b16 %v703, %v701
    %v826 = vpack.c.b16 %v706, %v704
    %v827 = vpack.c.b16 %v707, %v705
    %v828 = vpack.c.b16 %v710, %v708
    %v829 = vpack.c.b16 %v711, %v709
    %v830 = vpack.c.b16 %v714, %v712
    %v831 = vpack.c.b16 %v715, %v713
    %v832 = vpack.c.b16 %v718, %v716
    %v833 = vpack.c.b16 %v719, %v717
    %v834 = vpack.c.b16 %v722, %v720
    %v835 = vpack.c.b16 %v723, %v721
    %v836 = vpack.c.b16 %v726, %v724
    %v837 = vpack.c.b16 %v727, %v725
    %v838 = vpack.c.b16 %v730, %v728
    %v839 = vpack.c.b16 %v731, %v729
    %v840 = vpack.c.b16 %v734, %v732
    %v841 = vpack.c.b16 %v735, %v733
    %v842 = vpack.c.b16 %v738, %v736
    %v843 = vpack.c.b16 %v739, %v737
    %v844 = vpack.c.b16 %v742, %v740
    %v845 = vpack.c.b16 %v743, %v741
    %v846 = vpack.c.b16 %v746, %v744
    %v847 = vpack.c.b16 %v747, %v745
    %v848 = vpack.c.b16 %v750, %v748
    %v849 = vpack.c.b16 %v751, %v749
    %v850 = vpack.c.b16 %v754, %v752
    %v851 = vpack.c.b16 %v755, %v753
    %948 = vmatprep.subr.bf16.mxu0 %v757
    %949 = vmatpush1.bf16.msra.mxu0 %v756
    %950 = vmatprep.subr.bf16.mxu0 %v759
    %951 = vmatpush1.bf16.msra.mxu0 %v758
    %952 = vmatprep.subr.bf16.mxu0 %v761
    %953 = vmatpush1.bf16.msra.mxu0 %v760
    %954 = vmatprep.subr.bf16.mxu0 %v763
    %955 = vmatpush1.bf16.msra.mxu0 %v762
    %956 = vmatprep.subr.bf16.mxu0 %v765
    %957 = vmatpush1.bf16.msra.mxu0 %v764
    %958 = vmatprep.subr.bf16.mxu0 %v767
    %959 = vmatpush1.bf16.msra.mxu0 %v766
    %960 = vmatprep.subr.bf16.mxu0 %v769
    %961 = vmatpush1.bf16.msra.mxu0 %v768
    %962 = vmatprep.subr.bf16.mxu0 %v771
    %963 = vmatpush1.bf16.msra.mxu0 %v770
    %964 = vmatprep.subr.bf16.mxu0 %v773
    %965 = vmatpush1.bf16.msra.mxu0 %v772
    %966 = vmatprep.subr.bf16.mxu0 %v775
    %967 = vmatpush1.bf16.msra.mxu0 %v774
    %968 = vmatprep.subr.bf16.mxu0 %v777
    %969 = vmatpush1.bf16.msra.mxu0 %v776
    %970 = vmatprep.subr.bf16.mxu0 %v779
    %971 = vmatpush1.bf16.msra.mxu0 %v778
    %972 = vmatprep.subr.bf16.mxu0 %v781
    %973 = vmatpush1.bf16.msra.mxu0 %v780
    %974 = vmatprep.subr.bf16.mxu0 %v783
    %975 = vmatpush1.bf16.msra.mxu0 %v782
    %976 = vmatprep.subr.bf16.mxu0 %v785
    %977 = vmatpush1.bf16.msra.mxu0 %v784
    %978 = vmatprep.subr.bf16.mxu0 %v787
    %979 = vmatpush1.bf16.msra.mxu0 %v786
    %980 = vmatprep.mubr.bf16.mxu0 %v306
    %981 = vmatmul.mubr.bf16.gmra.mrb[0].mxu0 %v305
    %v982 = vpop.f32.mrb[0].mxu0
    %v983 = vadd.f32 %v461, %v982
    %v984 = vpop.f32.mrb[0].mxu0
    %v985 = vadd.f32 %v465, %v984
    %v986 = vpop.f32.mrb[0].mxu0
    %v987 = vadd.f32 %v461, %v986
    %v988 = vpop.f32.mrb[0].mxu0
    %v989 = vadd.f32 %v465, %v988
    %990 = vdwg.mxu0
    %991 = vmatprep.subr.bf16.mxu0 %v789
    %992 = vmatpush1.bf16.msra.mxu0 %v788
    %993 = vmatprep.subr.bf16.mxu0 %v791
    %994 = vmatpush1.bf16.msra.mxu0 %v790
    %995 = vmatprep.subr.bf16.mxu0 %v793
    %996 = vmatpush1.bf16.msra.mxu0 %v792
    %997 = vmatprep.subr.bf16.mxu0 %v795
    %998 = vmatpush1.bf16.msra.mxu0 %v794
    %999 = vmatprep.subr.bf16.mxu0 %v797
    %1000 = vmatpush1.bf16.msra.mxu0 %v796
    %1001 = vmatprep.subr.bf16.mxu0 %v799
    %1002 = vmatpush1.bf16.msra.mxu0 %v798
    %1003 = vmatprep.subr.bf16.mxu0 %v801
    %1004 = vmatpush1.bf16.msra.mxu0 %v800
    %1005 = vmatprep.subr.bf16.mxu0 %v803
    %1006 = vmatpush1.bf16.msra.mxu0 %v802
    %1007 = vmatprep.subr.bf16.mxu0 %v805
    %1008 = vmatpush1.bf16.msra.mxu0 %v804
    %1009 = vmatprep.subr.bf16.mxu0 %v807
    %1010 = vmatpush1.bf16.msra.mxu0 %v806
    %1011 = vmatprep.subr.bf16.mxu0 %v809
    %1012 = vmatpush1.bf16.msra.mxu0 %v808
    %1013 = vmatprep.subr.bf16.mxu0 %v811
    %1014 = vmatpush1.bf16.msra.mxu0 %v810
    %1015 = vmatprep.subr.bf16.mxu0 %v813
    %1016 = vmatpush1.bf16.msra.mxu0 %v812
    %1017 = vmatprep.subr.bf16.mxu0 %v815
    %1018 = vmatpush1.bf16.msra.mxu0 %v814
    %1019 = vmatprep.subr.bf16.mxu0 %v817
    %1020 = vmatpush1.bf16.msra.mxu0 %v816
    %1021 = vmatprep.subr.bf16.mxu0 %v819
    %1022 = vmatpush1.bf16.msra.mxu0 %v818
    %1023 = vmatprep.mubr.bf16.mxu0 %v345
    %1024 = vmatmul.mubr.bf16.gmra.mrb[0].mxu0 %v333
    %v1025 = vpop.f32.mrb[0].mxu0
    %v1026 = vadd.f32 %v983, %v1025
    %v1027 = vpop.f32.mrb[0].mxu0
    %v1028 = vadd.f32 %v985, %v1027
    %v1029 = vpop.f32.mrb[0].mxu0
    %v1030 = vadd.f32 %v987, %v1029
    %v1031 = vpop.f32.mrb[0].mxu0
    %v1032 = vadd.f32 %v989, %v1031
    %1033 = vdwg.mxu0
    %1034 = vmatprep.subr.bf16.mxu0 %v821
    %1035 = vmatpush1.bf16.msra.mxu0 %v820
    %1036 = vmatprep.subr.bf16.mxu0 %v823
    %1037 = vmatpush1.bf16.msra.mxu0 %v822
    %1038 = vmatprep.subr.bf16.mxu0 %v825
    %1039 = vmatpush1.bf16.msra.mxu0 %v824
    %1040 = vmatprep.subr.bf16.mxu0 %v827
    %1041 = vmatpush1.bf16.msra.mxu0 %v826
    %1042 = vmatprep.subr.bf16.mxu0 %v829
    %1043 = vmatpush1.bf16.msra.mxu0 %v828
    %1044 = vmatprep.subr.bf16.mxu0 %v831
    %1045 = vmatpush1.bf16.msra.mxu0 %v830
    %1046 = vmatprep.subr.bf16.mxu0 %v833
    %1047 = vmatpush1.bf16.msra.mxu0 %v832
    %1048 = vmatprep.subr.bf16.mxu0 %v835
    %1049 = vmatpush1.bf16.msra.mxu0 %v834
    %1050 = vmatprep.subr.bf16.mxu0 %v837
    %1051 = vmatpush1.bf16.msra.mxu0 %v836
    %1052 = vmatprep.subr.bf16.mxu0 %v839
    %1053 = vmatpush1.bf16.msra.mxu0 %v838
    %1054 = vmatprep.subr.bf16.mxu0 %v841
    %1055 = vmatpush1.bf16.msra.mxu0 %v840
    %1056 = vmatprep.subr.bf16.mxu0 %v843
    %1057 = vmatpush1.bf16.msra.mxu0 %v842
    %1058 = vmatprep.subr.bf16.mxu0 %v845
    %1059 = vmatpush1.bf16.msra.mxu0 %v844
    %1060 = vmatprep.subr.bf16.mxu0 %v847
    %1061 = vmatpush1.bf16.msra.mxu0 %v846
    %1062 = vmatprep.subr.bf16.mxu0 %v849
    %1063 = vmatpush1.bf16.msra.mxu0 %v848
    %1064 = vmatprep.subr.bf16.mxu0 %v851
    %1065 = vmatpush1.bf16.msra.mxu0 %v850
    %1066 = vmatprep.mubr.bf16.mxu0 %v358
    %1067 = vmatmul.mubr.bf16.gmra.mrb[0].mxu0 %v355
    %v1068 = vpop.f32.mrb[0].mxu0
    %v1069 = vadd.f32 %v1026, %v1068
    %v1070 = vpop.f32.mrb[0].mxu0
    %v1071 = vadd.f32 %v1028, %v1070
    %v1072 = vpop.f32.mrb[0].mxu0
    %v1073 = vadd.f32 %v1030, %v1072
    %v1074 = vpop.f32.mrb[0].mxu0
    %v1075 = vadd.f32 %v1032, %v1074
    %1076 = vdwg.mxu0
    %v1077 = vmax.f32 %v1069, 0.0
    %v1078 = vmax.f32 %v1071, 0.0
    %v1079 = vmax.f32 %v1073, 0.0
    %v1080 = vmax.f32 %v1075, 0.0
    %v1081 = vpack.c.bf16 %v1079, %v1077
    %v1082 = vpack.c.bf16 %v1080, %v1078
    %v1085 = vunpack.c.l.b16 %v1081
    %v1086 = vunpack.c.l.b16 %v1082
    %v1087 = vpack.c.b16 %v1086, %v1085
    %1089 = vst [vmem:[#allocation3] sm:$0xff] %v1087
    %v1090 = vunpack.c.h.b16 %v1081
    %v1091 = vunpack.c.h.b16 %v1082
    %v1092 = vpack.c.b16 %v1091, %v1090
    %s1094 = scalar_lea.vmem [#allocation3], 8
    %1095 = vst [vmem:[%s1094] sm:$0xff] %v1092
    %v1096 = vld [vmem:[#allocation3] sm:$0x11]
    %v1097 = vld [vmem:[#allocation3 + $0x8] sm:$0x11]
    %v1098 = vld [vmem:[#allocation4 + $0x318] sm:$0xff]
    %v1099 = vld [vmem:[#allocation4 + $0x320] sm:$0xff]
    %v1100 = vld [vmem:[#allocation4 + $0x328] sm:$0xff]
    %v1101 = vld [vmem:[#allocation4 + $0x330] sm:$0xff]
    %v1102 = vld [vmem:[#allocation4 + $0x338] sm:$0xff]
    %v1103 = vld [vmem:[#allocation4 + $0x340] sm:$0xff]
    %v1104 = vld [vmem:[#allocation4 + $0x348] sm:$0xff]
    %v1105 = vld [vmem:[#allocation4 + $0x350] sm:$0xff]
    %v1106 = vld [vmem:[#allocation4 + $0x358] sm:$0xff]
    %v1107 = vld [vmem:[#allocation4 + $0x360] sm:$0xff]
    %v1108 = vld [vmem:[#allocation4 + $0x368] sm:$0xff]
    %v1109 = vld [vmem:[#allocation4 + $0x370] sm:$0xff]
    %v1110 = vld [vmem:[#allocation4 + $0x378] sm:$0xff]
    %v1111 = vld [vmem:[#allocation4 + $0x380] sm:$0xff]
    %v1112 = vld [vmem:[#allocation4 + $0x388] sm:$0xff]
    %v1113 = vld [vmem:[#allocation4 + $0x390] sm:$0xff]
    %v1114 = vld [vmem:[#allocation4 + $0x398] sm:$0xff]
    %v1115 = vld [vmem:[#allocation4 + $0x3a0] sm:$0xff]
    %v1116 = vld [vmem:[#allocation4 + $0x3a8] sm:$0xff]
    %v1117 = vld [vmem:[#allocation4 + $0x3b0] sm:$0xff]
    %v1118 = vld [vmem:[#allocation4 + $0x3b8] sm:$0xff]
    %v1119 = vld [vmem:[#allocation4 + $0x3c0] sm:$0xff]
    %v1120 = vld [vmem:[#allocation4 + $0x3c8] sm:$0xff]
    %v1121 = vld [vmem:[#allocation4 + $0x3d0] sm:$0xff]
    %v1122 = vld [vmem:[#allocation4 + $0x3d8] sm:$0xff]
    %v1123 = vld [vmem:[#allocation4 + $0x3e0] sm:$0xff]
    %v1124 = vld [vmem:[#allocation4 + $0x3e8] sm:$0xff]
    %v1125 = vld [vmem:[#allocation4 + $0x3f0] sm:$0xff]
    %v1126 = vld [vmem:[#allocation4 + $0x3f8] sm:$0xff]
    %v1127 = vld [vmem:[#allocation4 + $0x400] sm:$0xff]
    %v1128 = vld [vmem:[#allocation4 + $0x408] sm:$0xff]
    %v1129 = vld [vmem:[#allocation4 + $0x410] sm:$0xff]
    %v1130 = vld [vmem:[#allocation4 + $0x418] sm:$0xff]
    %v1131 = vld [vmem:[#allocation4 + $0x420] sm:$0xff]
    %v1132 = vld [vmem:[#allocation4 + $0x428] sm:$0xff]
    %v1133 = vld [vmem:[#allocation4 + $0x430] sm:$0xff]
    %v1134 = vld [vmem:[#allocation4 + $0x438] sm:$0xff]
    %v1135 = vld [vmem:[#allocation4 + $0x440] sm:$0xff]
    %v1136 = vld [vmem:[#allocation4 + $0x448] sm:$0xff]
    %v1137 = vld [vmem:[#allocation4 + $0x450] sm:$0xff]
    %v1138 = vld [vmem:[#allocation4 + $0x458] sm:$0xff]
    %v1139 = vld [vmem:[#allocation4 + $0x460] sm:$0xff]
    %v1140 = vld [vmem:[#allocation4 + $0x468] sm:$0xff]
    %v1141 = vld [vmem:[#allocation4 + $0x470] sm:$0xff]
    %v1142 = vld [vmem:[#allocation4 + $0x478] sm:$0xff]
    %v1143 = vld [vmem:[#allocation4 + $0x480] sm:$0xff]
    %v1144 = vld [vmem:[#allocation4 + $0x488] sm:$0xff]
    %v1145 = vld [vmem:[#allocation4 + $0x490] sm:$0xff]
    %v1146 = vld [vmem:[#allocation4 + $0x498] sm:$0xff]
    %v1147 = vld [vmem:[#allocation4 + $0x4a0] sm:$0xff]
    %v1148 = vld [vmem:[#allocation4 + $0x4a8] sm:$0xff]
    %v1149 = vld [vmem:[#allocation4 + $0x4b0] sm:$0xff]
    %v1150 = vld [vmem:[#allocation4 + $0x4b8] sm:$0xff]
    %v1151 = vld [vmem:[#allocation4 + $0x4c0] sm:$0xff]
    %v1152 = vld [vmem:[#allocation4 + $0x4c8] sm:$0xff]
    %v1153 = vld [vmem:[#allocation4 + $0x4d0] sm:$0xff]
    %v1154 = vld [vmem:[#allocation4 + $0x4d8] sm:$0xff]
    %v1155 = vld [vmem:[#allocation4 + $0x4e0] sm:$0xff]
    %v1156 = vld [vmem:[#allocation4 + $0x4e8] sm:$0xff]
    %v1157 = vld [vmem:[#allocation4 + $0x4f0] sm:$0xff]
    %v1158 = vld [vmem:[#allocation4 + $0x4f8] sm:$0xff]
    %v1159 = vld [vmem:[#allocation4 + $0x500] sm:$0xff]
    %v1160 = vld [vmem:[#allocation4 + $0x508] sm:$0xff]
    %v1161 = vld [vmem:[#allocation4 + $0x510] sm:$0xff]
    %v1164 = vunpack.c.l.b16 %v1096
    %v1165 = vunpack.c.h.b16 %v1096
    %v1166 = vunpack.c.l.b16 %v1097
    %v1167 = vunpack.c.h.b16 %v1097
    %v1168 = vpack.c.b16 %v1164, %v1164
    %v1169 = vpack.c.b16 %v1165, %v1165
    %v1170 = vpack.c.b16 %v1166, %v1166
    %v1171 = vpack.c.b16 %v1167, %v1167
    %v1172 = vunpack.c.l.b16 %v1168
    %v1173 = vunpack.c.l.b16 %v1169
    %v1174 = vunpack.c.l.b16 %v1170
    %v1175 = vunpack.c.l.b16 %v1171
    %v1176 = vrot.slane %v1172, 1
    %vm1177 = vcmask 1041409
    %v1178 = vsel %vm1177, %v1174, %v1176
    %v1179 = vrot.slane %v1173, 1
    %v1180 = vsel %vm1177, %v1175, %v1179
    %v1181 = vpack.c.b16 %v1178, %v1178
    %v1182 = vpack.c.b16 %v1180, %v1180
    %v1217 = vunpack.c.l.b16 %v1130
    %v1218 = vunpack.c.h.b16 %v1130
    %v1219 = vunpack.c.l.b16 %v1131
    %v1220 = vunpack.c.h.b16 %v1131
    %v1221 = vunpack.c.l.b16 %v1132
    %v1222 = vunpack.c.h.b16 %v1132
    %v1223 = vunpack.c.l.b16 %v1133
    %v1224 = vunpack.c.h.b16 %v1133
    %v1225 = vunpack.c.l.b16 %v1134
    %v1226 = vunpack.c.h.b16 %v1134
    %v1227 = vunpack.c.l.b16 %v1135
    %v1228 = vunpack.c.h.b16 %v1135
    %v1229 = vunpack.c.l.b16 %v1136
    %v1230 = vunpack.c.h.b16 %v1136
    %v1231 = vunpack.c.l.b16 %v1137
    %v1232 = vunpack.c.h.b16 %v1137
    %v1233 = vunpack.c.l.b16 %v1138
    %v1234 = vunpack.c.h.b16 %v1138
    %v1235 = vunpack.c.l.b16 %v1139
    %v1236 = vunpack.c.h.b16 %v1139
    %v1237 = vunpack.c.l.b16 %v1140
    %v1238 = vunpack.c.h.b16 %v1140
    %v1239 = vunpack.c.l.b16 %v1141
    %v1240 = vunpack.c.h.b16 %v1141
    %v1241 = vunpack.c.l.b16 %v1142
    %v1242 = vunpack.c.h.b16 %v1142
    %v1243 = vunpack.c.l.b16 %v1143
    %v1244 = vunpack.c.h.b16 %v1143
    %v1245 = vunpack.c.l.b16 %v1144
    %v1246 = vunpack.c.h.b16 %v1144
    %v1247 = vunpack.c.l.b16 %v1145
    %v1248 = vunpack.c.h.b16 %v1145
    %v1249 = vunpack.c.l.b16 %v1146
    %v1250 = vunpack.c.h.b16 %v1146
    %v1251 = vunpack.c.l.b16 %v1147
    %v1252 = vunpack.c.h.b16 %v1147
    %v1253 = vunpack.c.l.b16 %v1148
    %v1254 = vunpack.c.h.b16 %v1148
    %v1255 = vunpack.c.l.b16 %v1149
    %v1256 = vunpack.c.h.b16 %v1149
    %v1257 = vunpack.c.l.b16 %v1150
    %v1258 = vunpack.c.h.b16 %v1150
    %v1259 = vunpack.c.l.b16 %v1151
    %v1260 = vunpack.c.h.b16 %v1151
    %v1261 = vunpack.c.l.b16 %v1152
    %v1262 = vunpack.c.h.b16 %v1152
    %v1263 = vunpack.c.l.b16 %v1153
    %v1264 = vunpack.c.h.b16 %v1153
    %v1265 = vunpack.c.l.b16 %v1154
    %v1266 = vunpack.c.h.b16 %v1154
    %v1267 = vunpack.c.l.b16 %v1155
    %v1268 = vunpack.c.h.b16 %v1155
    %v1269 = vunpack.c.l.b16 %v1156
    %v1270 = vunpack.c.h.b16 %v1156
    %v1271 = vunpack.c.l.b16 %v1157
    %v1272 = vunpack.c.h.b16 %v1157
    %v1273 = vunpack.c.l.b16 %v1158
    %v1274 = vunpack.c.h.b16 %v1158
    %v1275 = vunpack.c.l.b16 %v1159
    %v1276 = vunpack.c.h.b16 %v1159
    %v1277 = vunpack.c.l.b16 %v1160
    %v1278 = vunpack.c.h.b16 %v1160
    %v1279 = vunpack.c.l.b16 %v1161
    %v1280 = vunpack.c.h.b16 %v1161
    %v1281 = vpack.c.b16 %v1219, %v1217
    %v1282 = vpack.c.b16 %v1220, %v1218
    %v1283 = vpack.c.b16 %v1223, %v1221
    %v1284 = vpack.c.b16 %v1224, %v1222
    %v1285 = vpack.c.b16 %v1227, %v1225
    %v1286 = vpack.c.b16 %v1228, %v1226
    %v1287 = vpack.c.b16 %v1231, %v1229
    %v1288 = vpack.c.b16 %v1232, %v1230
    %v1289 = vpack.c.b16 %v1235, %v1233
    %v1290 = vpack.c.b16 %v1236, %v1234
    %v1291 = vpack.c.b16 %v1239, %v1237
    %v1292 = vpack.c.b16 %v1240, %v1238
    %v1293 = vpack.c.b16 %v1243, %v1241
    %v1294 = vpack.c.b16 %v1244, %v1242
    %v1295 = vpack.c.b16 %v1247, %v1245
    %v1296 = vpack.c.b16 %v1248, %v1246
    %v1297 = vpack.c.b16 %v1251, %v1249
    %v1298 = vpack.c.b16 %v1252, %v1250
    %v1299 = vpack.c.b16 %v1255, %v1253
    %v1300 = vpack.c.b16 %v1256, %v1254
    %v1301 = vpack.c.b16 %v1259, %v1257
    %v1302 = vpack.c.b16 %v1260, %v1258
    %v1303 = vpack.c.b16 %v1263, %v1261
    %v1304 = vpack.c.b16 %v1264, %v1262
    %v1305 = vpack.c.b16 %v1267, %v1265
    %v1306 = vpack.c.b16 %v1268, %v1266
    %v1307 = vpack.c.b16 %v1271, %v1269
    %v1308 = vpack.c.b16 %v1272, %v1270
    %v1309 = vpack.c.b16 %v1275, %v1273
    %v1310 = vpack.c.b16 %v1276, %v1274
    %v1311 = vpack.c.b16 %v1279, %v1277
    %v1312 = vpack.c.b16 %v1280, %v1278
    %1345 = vmatprep.subr.bf16.mxu0 %v1282
    %1346 = vmatpush1.bf16.msra.mxu0 %v1281
    %1347 = vmatprep.subr.bf16.mxu0 %v1284
    %1348 = vmatpush1.bf16.msra.mxu0 %v1283
    %1349 = vmatprep.subr.bf16.mxu0 %v1286
    %1350 = vmatpush1.bf16.msra.mxu0 %v1285
    %1351 = vmatprep.subr.bf16.mxu0 %v1288
    %1352 = vmatpush1.bf16.msra.mxu0 %v1287
    %1353 = vmatprep.subr.bf16.mxu0 %v1290
    %1354 = vmatpush1.bf16.msra.mxu0 %v1289
    %1355 = vmatprep.subr.bf16.mxu0 %v1292
    %1356 = vmatpush1.bf16.msra.mxu0 %v1291
    %1357 = vmatprep.subr.bf16.mxu0 %v1294
    %1358 = vmatpush1.bf16.msra.mxu0 %v1293
    %1359 = vmatprep.subr.bf16.mxu0 %v1296
    %1360 = vmatpush1.bf16.msra.mxu0 %v1295
    %1361 = vmatprep.subr.bf16.mxu0 %v1298
    %1362 = vmatpush1.bf16.msra.mxu0 %v1297
    %1363 = vmatprep.subr.bf16.mxu0 %v1300
    %1364 = vmatpush1.bf16.msra.mxu0 %v1299
    %1365 = vmatprep.subr.bf16.mxu0 %v1302
    %1366 = vmatpush1.bf16.msra.mxu0 %v1301
    %1367 = vmatprep.subr.bf16.mxu0 %v1304
    %1368 = vmatpush1.bf16.msra.mxu0 %v1303
    %1369 = vmatprep.subr.bf16.mxu0 %v1306
    %1370 = vmatpush1.bf16.msra.mxu0 %v1305
    %1371 = vmatprep.subr.bf16.mxu0 %v1308
    %1372 = vmatpush1.bf16.msra.mxu0 %v1307
    %1373 = vmatprep.subr.bf16.mxu0 %v1310
    %1374 = vmatpush1.bf16.msra.mxu0 %v1309
    %1375 = vmatprep.subr.bf16.mxu0 %v1312
    %1376 = vmatpush1.bf16.msra.mxu0 %v1311
    %1377 = vmatprep.mubr.bf16.mxu0 %v1182
    %1378 = vmatmul.mubr.bf16.gmra.mrb[0].mxu0 %v1181
    %v1379 = vpop.f32.mrb[0].mxu0
    %v1380 = vadd.f32 0.0, %v1379
    %v1381 = vpop.f32.mrb[0].mxu0
    %v1382 = vadd.f32 0.0, %v1381
    %v1383 = vpop.f32.mrb[0].mxu0
    %v1384 = vpop.f32.mrb[0].mxu0
    %1385 = vdwg.mxu0
    %v1386 = vrot.slane %v1174, 7
    %v1387 = vsel %vm1177, %v1386, %v1172
    %v1388 = vrot.slane %v1175, 7
    %v1389 = vsel %vm1177, %v1388, %v1173
    %v1390 = vpack.c.b16 %v1387, %v1387
    %v1391 = vpack.c.b16 %v1389, %v1389
    %v1426 = vunpack.c.l.b16 %v1098
    %v1427 = vunpack.c.h.b16 %v1098
    %v1428 = vunpack.c.l.b16 %v1099
    %v1429 = vunpack.c.h.b16 %v1099
    %v1430 = vunpack.c.l.b16 %v1100
    %v1431 = vunpack.c.h.b16 %v1100
    %v1432 = vunpack.c.l.b16 %v1101
    %v1433 = vunpack.c.h.b16 %v1101
    %v1434 = vunpack.c.l.b16 %v1102
    %v1435 = vunpack.c.h.b16 %v1102
    %v1436 = vunpack.c.l.b16 %v1103
    %v1437 = vunpack.c.h.b16 %v1103
    %v1438 = vunpack.c.l.b16 %v1104
    %v1439 = vunpack.c.h.b16 %v1104
    %v1440 = vunpack.c.l.b16 %v1105
    %v1441 = vunpack.c.h.b16 %v1105
    %v1442 = vunpack.c.l.b16 %v1106
    %v1443 = vunpack.c.h.b16 %v1106
    %v1444 = vunpack.c.l.b16 %v1107
    %v1445 = vunpack.c.h.b16 %v1107
    %v1446 = vunpack.c.l.b16 %v1108
    %v1447 = vunpack.c.h.b16 %v1108
    %v1448 = vunpack.c.l.b16 %v1109
    %v1449 = vunpack.c.h.b16 %v1109
    %v1450 = vunpack.c.l.b16 %v1110
    %v1451 = vunpack.c.h.b16 %v1110
    %v1452 = vunpack.c.l.b16 %v1111
    %v1453 = vunpack.c.h.b16 %v1111
    %v1454 = vunpack.c.l.b16 %v1112
    %v1455 = vunpack.c.h.b16 %v1112
    %v1456 = vunpack.c.l.b16 %v1113
    %v1457 = vunpack.c.h.b16 %v1113
    %v1458 = vunpack.c.l.b16 %v1114
    %v1459 = vunpack.c.h.b16 %v1114
    %v1460 = vunpack.c.l.b16 %v1115
    %v1461 = vunpack.c.h.b16 %v1115
    %v1462 = vunpack.c.l.b16 %v1116
    %v1463 = vunpack.c.h.b16 %v1116
    %v1464 = vunpack.c.l.b16 %v1117
    %v1465 = vunpack.c.h.b16 %v1117
    %v1466 = vunpack.c.l.b16 %v1118
    %v1467 = vunpack.c.h.b16 %v1118
    %v1468 = vunpack.c.l.b16 %v1119
    %v1469 = vunpack.c.h.b16 %v1119
    %v1470 = vunpack.c.l.b16 %v1120
    %v1471 = vunpack.c.h.b16 %v1120
    %v1472 = vunpack.c.l.b16 %v1121
    %v1473 = vunpack.c.h.b16 %v1121
    %v1474 = vunpack.c.l.b16 %v1122
    %v1475 = vunpack.c.h.b16 %v1122
    %v1476 = vunpack.c.l.b16 %v1123
    %v1477 = vunpack.c.h.b16 %v1123
    %v1478 = vunpack.c.l.b16 %v1124
    %v1479 = vunpack.c.h.b16 %v1124
    %v1480 = vunpack.c.l.b16 %v1125
    %v1481 = vunpack.c.h.b16 %v1125
    %v1482 = vunpack.c.l.b16 %v1126
    %v1483 = vunpack.c.h.b16 %v1126
    %v1484 = vunpack.c.l.b16 %v1127
    %v1485 = vunpack.c.h.b16 %v1127
    %v1486 = vunpack.c.l.b16 %v1128
    %v1487 = vunpack.c.h.b16 %v1128
    %v1488 = vunpack.c.l.b16 %v1129
    %v1489 = vunpack.c.h.b16 %v1129
    %v1490 = vpack.c.b16 %v1428, %v1426
    %v1491 = vpack.c.b16 %v1429, %v1427
    %v1492 = vpack.c.b16 %v1432, %v1430
    %v1493 = vpack.c.b16 %v1433, %v1431
    %v1494 = vpack.c.b16 %v1436, %v1434
    %v1495 = vpack.c.b16 %v1437, %v1435
    %v1496 = vpack.c.b16 %v1440, %v1438
    %v1497 = vpack.c.b16 %v1441, %v1439
    %v1498 = vpack.c.b16 %v1444, %v1442
    %v1499 = vpack.c.b16 %v1445, %v1443
    %v1500 = vpack.c.b16 %v1448, %v1446
    %v1501 = vpack.c.b16 %v1449, %v1447
    %v1502 = vpack.c.b16 %v1452, %v1450
    %v1503 = vpack.c.b16 %v1453, %v1451
    %v1504 = vpack.c.b16 %v1456, %v1454
    %v1505 = vpack.c.b16 %v1457, %v1455
    %v1506 = vpack.c.b16 %v1460, %v1458
    %v1507 = vpack.c.b16 %v1461, %v1459
    %v1508 = vpack.c.b16 %v1464, %v1462
    %v1509 = vpack.c.b16 %v1465, %v1463
    %v1510 = vpack.c.b16 %v1468, %v1466
    %v1511 = vpack.c.b16 %v1469, %v1467
    %v1512 = vpack.c.b16 %v1472, %v1470
    %v1513 = vpack.c.b16 %v1473, %v1471
    %v1514 = vpack.c.b16 %v1476, %v1474
    %v1515 = vpack.c.b16 %v1477, %v1475
    %v1516 = vpack.c.b16 %v1480, %v1478
    %v1517 = vpack.c.b16 %v1481, %v1479
    %v1518 = vpack.c.b16 %v1484, %v1482
    %v1519 = vpack.c.b16 %v1485, %v1483
    %v1520 = vpack.c.b16 %v1488, %v1486
    %v1521 = vpack.c.b16 %v1489, %v1487
    %1554 = vmatprep.subr.bf16.mxu0 %v1491
    %1555 = vmatpush1.bf16.msra.mxu0 %v1490
    %1556 = vmatprep.subr.bf16.mxu0 %v1493
    %1557 = vmatpush1.bf16.msra.mxu0 %v1492
    %1558 = vmatprep.subr.bf16.mxu0 %v1495
    %1559 = vmatpush1.bf16.msra.mxu0 %v1494
    %1560 = vmatprep.subr.bf16.mxu0 %v1497
    %1561 = vmatpush1.bf16.msra.mxu0 %v1496
    %1562 = vmatprep.subr.bf16.mxu0 %v1499
    %1563 = vmatpush1.bf16.msra.mxu0 %v1498
    %1564 = vmatprep.subr.bf16.mxu0 %v1501
    %1565 = vmatpush1.bf16.msra.mxu0 %v1500
    %1566 = vmatprep.subr.bf16.mxu0 %v1503
    %1567 = vmatpush1.bf16.msra.mxu0 %v1502
    %1568 = vmatprep.subr.bf16.mxu0 %v1505
    %1569 = vmatpush1.bf16.msra.mxu0 %v1504
    %1570 = vmatprep.subr.bf16.mxu0 %v1507
    %1571 = vmatpush1.bf16.msra.mxu0 %v1506
    %1572 = vmatprep.subr.bf16.mxu0 %v1509
    %1573 = vmatpush1.bf16.msra.mxu0 %v1508
    %1574 = vmatprep.subr.bf16.mxu0 %v1511
    %1575 = vmatpush1.bf16.msra.mxu0 %v1510
    %1576 = vmatprep.subr.bf16.mxu0 %v1513
    %1577 = vmatpush1.bf16.msra.mxu0 %v1512
    %1578 = vmatprep.subr.bf16.mxu0 %v1515
    %1579 = vmatpush1.bf16.msra.mxu0 %v1514
    %1580 = vmatprep.subr.bf16.mxu0 %v1517
    %1581 = vmatpush1.bf16.msra.mxu0 %v1516
    %1582 = vmatprep.subr.bf16.mxu0 %v1519
    %1583 = vmatpush1.bf16.msra.mxu0 %v1518
    %1584 = vmatprep.subr.bf16.mxu0 %v1521
    %1585 = vmatpush1.bf16.msra.mxu0 %v1520
    %1586 = vmatprep.mubr.bf16.mxu0 %v1391
    %1587 = vmatmul.mubr.bf16.gmra.mrb[0].mxu0 %v1390
    %v1588 = vpop.f32.mrb[0].mxu0
    %v1589 = vadd.f32 %v1380, %v1588
    %v1590 = vpop.f32.mrb[0].mxu0
    %v1591 = vadd.f32 %v1382, %v1590
    %v1592 = vpop.f32.mrb[0].mxu0
    %v1593 = vpop.f32.mrb[0].mxu0
    %1594 = vdwg.mxu0
    %v1595 = vld [vmem:[#allocation3] sm:$0x22]
    %v1596 = vld [vmem:[#allocation3 + $0x8] sm:$0x22]
    %v1597 = vld [vmem:[#allocation4 + $0x518] sm:$0xff]
    %v1598 = vld [vmem:[#allocation4 + $0x520] sm:$0xff]
    %v1599 = vld [vmem:[#allocation4 + $0x528] sm:$0xff]
    %v1600 = vld [vmem:[#allocation4 + $0x530] sm:$0xff]
    %v1601 = vld [vmem:[#allocation4 + $0x538] sm:$0xff]
    %v1602 = vld [vmem:[#allocation4 + $0x540] sm:$0xff]
    %v1603 = vld [vmem:[#allocation4 + $0x548] sm:$0xff]
    %v1604 = vld [vmem:[#allocation4 + $0x550] sm:$0xff]
    %v1605 = vld [vmem:[#allocation4 + $0x558] sm:$0xff]
    %v1606 = vld [vmem:[#allocation4 + $0x560] sm:$0xff]
    %v1607 = vld [vmem:[#allocation4 + $0x568] sm:$0xff]
    %v1608 = vld [vmem:[#allocation4 + $0x570] sm:$0xff]
    %v1609 = vld [vmem:[#allocation4 + $0x578] sm:$0xff]
    %v1610 = vld [vmem:[#allocation4 + $0x580] sm:$0xff]
    %v1611 = vld [vmem:[#allocation4 + $0x588] sm:$0xff]
    %v1612 = vld [vmem:[#allocation4 + $0x590] sm:$0xff]
    %v1613 = vld [vmem:[#allocation4 + $0x598] sm:$0xff]
    %v1614 = vld [vmem:[#allocation4 + $0x5a0] sm:$0xff]
    %v1615 = vld [vmem:[#allocation4 + $0x5a8] sm:$0xff]
    %v1616 = vld [vmem:[#allocation4 + $0x5b0] sm:$0xff]
    %v1617 = vld [vmem:[#allocation4 + $0x5b8] sm:$0xff]
    %v1618 = vld [vmem:[#allocation4 + $0x5c0] sm:$0xff]
    %v1619 = vld [vmem:[#allocation4 + $0x5c8] sm:$0xff]
    %v1620 = vld [vmem:[#allocation4 + $0x5d0] sm:$0xff]
    %v1621 = vld [vmem:[#allocation4 + $0x5d8] sm:$0xff]
    %v1622 = vld [vmem:[#allocation4 + $0x5e0] sm:$0xff]
    %v1623 = vld [vmem:[#allocation4 + $0x5e8] sm:$0xff]
    %v1624 = vld [vmem:[#allocation4 + $0x5f0] sm:$0xff]
    %v1625 = vld [vmem:[#allocation4 + $0x5f8] sm:$0xff]
    %v1626 = vld [vmem:[#allocation4 + $0x600] sm:$0xff]
    %v1627 = vld [vmem:[#allocation4 + $0x608] sm:$0xff]
    %v1628 = vld [vmem:[#allocation4 + $0x610] sm:$0xff]
    %v1631 = vunpack.c.l.b16 %v1595
    %v1632 = vunpack.c.h.b16 %v1595
    %v1633 = vunpack.c.l.b16 %v1596
    %v1634 = vunpack.c.h.b16 %v1596
    %v1635 = vpack.c.b16 %v1631, %v1631
    %v1636 = vpack.c.b16 %v1632, %v1632
    %v1637 = vpack.c.b16 %v1633, %v1633
    %v1638 = vpack.c.b16 %v1634, %v1634
    %v1639 = vunpack.c.l.b16 %v1635
    %v1640 = vunpack.c.l.b16 %v1636
    %v1641 = vunpack.c.l.b16 %v1637
    %v1642 = vunpack.c.l.b16 %v1638
    %v1643 = vrot.slane %v1639, 2
    %v1644 = vrot.slane %v1641, 1
    %v1645 = vsel %vm1177, %v1644, %v1643
    %v1646 = vrot.slane %v1640, 2
    %v1647 = vrot.slane %v1642, 1
    %v1648 = vsel %vm1177, %v1647, %v1646
    %v1649 = vpack.c.b16 %v1645, %v1645
    %v1650 = vpack.c.b16 %v1648, %v1648
    %v1685 = vunpack.c.l.b16 %v1597
    %v1686 = vunpack.c.h.b16 %v1597
    %v1687 = vunpack.c.l.b16 %v1598
    %v1688 = vunpack.c.h.b16 %v1598
    %v1689 = vunpack.c.l.b16 %v1599
    %v1690 = vunpack.c.h.b16 %v1599
    %v1691 = vunpack.c.l.b16 %v1600
    %v1692 = vunpack.c.h.b16 %v1600
    %v1693 = vunpack.c.l.b16 %v1601
    %v1694 = vunpack.c.h.b16 %v1601
    %v1695 = vunpack.c.l.b16 %v1602
    %v1696 = vunpack.c.h.b16 %v1602
    %v1697 = vunpack.c.l.b16 %v1603
    %v1698 = vunpack.c.h.b16 %v1603
    %v1699 = vunpack.c.l.b16 %v1604
    %v1700 = vunpack.c.h.b16 %v1604
    %v1701 = vunpack.c.l.b16 %v1605
    %v1702 = vunpack.c.h.b16 %v1605
    %v1703 = vunpack.c.l.b16 %v1606
    %v1704 = vunpack.c.h.b16 %v1606
    %v1705 = vunpack.c.l.b16 %v1607
    %v1706 = vunpack.c.h.b16 %v1607
    %v1707 = vunpack.c.l.b16 %v1608
    %v1708 = vunpack.c.h.b16 %v1608
    %v1709 = vunpack.c.l.b16 %v1609
    %v1710 = vunpack.c.h.b16 %v1609
    %v1711 = vunpack.c.l.b16 %v1610
    %v1712 = vunpack.c.h.b16 %v1610
    %v1713 = vunpack.c.l.b16 %v1611
    %v1714 = vunpack.c.h.b16 %v1611
    %v1715 = vunpack.c.l.b16 %v1612
    %v1716 = vunpack.c.h.b16 %v1612
    %v1717 = vunpack.c.l.b16 %v1613
    %v1718 = vunpack.c.h.b16 %v1613
    %v1719 = vunpack.c.l.b16 %v1614
    %v1720 = vunpack.c.h.b16 %v1614
    %v1721 = vunpack.c.l.b16 %v1615
    %v1722 = vunpack.c.h.b16 %v1615
    %v1723 = vunpack.c.l.b16 %v1616
    %v1724 = vunpack.c.h.b16 %v1616
    %v1725 = vunpack.c.l.b16 %v1617
    %v1726 = vunpack.c.h.b16 %v1617
    %v1727 = vunpack.c.l.b16 %v1618
    %v1728 = vunpack.c.h.b16 %v1618
    %v1729 = vunpack.c.l.b16 %v1619
    %v1730 = vunpack.c.h.b16 %v1619
    %v1731 = vunpack.c.l.b16 %v1620
    %v1732 = vunpack.c.h.b16 %v1620
    %v1733 = vunpack.c.l.b16 %v1621
    %v1734 = vunpack.c.h.b16 %v1621
    %v1735 = vunpack.c.l.b16 %v1622
    %v1736 = vunpack.c.h.b16 %v1622
    %v1737 = vunpack.c.l.b16 %v1623
    %v1738 = vunpack.c.h.b16 %v1623
    %v1739 = vunpack.c.l.b16 %v1624
    %v1740 = vunpack.c.h.b16 %v1624
    %v1741 = vunpack.c.l.b16 %v1625
    %v1742 = vunpack.c.h.b16 %v1625
    %v1743 = vunpack.c.l.b16 %v1626
    %v1744 = vunpack.c.h.b16 %v1626
    %v1745 = vunpack.c.l.b16 %v1627
    %v1746 = vunpack.c.h.b16 %v1627
    %v1747 = vunpack.c.l.b16 %v1628
    %v1748 = vunpack.c.h.b16 %v1628
    %v1749 = vpack.c.b16 %v1687, %v1685
    %v1750 = vpack.c.b16 %v1688, %v1686
    %v1751 = vpack.c.b16 %v1691, %v1689
    %v1752 = vpack.c.b16 %v1692, %v1690
    %v1753 = vpack.c.b16 %v1695, %v1693
    %v1754 = vpack.c.b16 %v1696, %v1694
    %v1755 = vpack.c.b16 %v1699, %v1697
    %v1756 = vpack.c.b16 %v1700, %v1698
    %v1757 = vpack.c.b16 %v1703, %v1701
    %v1758 = vpack.c.b16 %v1704, %v1702
    %v1759 = vpack.c.b16 %v1707, %v1705
    %v1760 = vpack.c.b16 %v1708, %v1706
    %v1761 = vpack.c.b16 %v1711, %v1709
    %v1762 = vpack.c.b16 %v1712, %v1710
    %v1763 = vpack.c.b16 %v1715, %v1713
    %v1764 = vpack.c.b16 %v1716, %v1714
    %v1765 = vpack.c.b16 %v1719, %v1717
    %v1766 = vpack.c.b16 %v1720, %v1718
    %v1767 = vpack.c.b16 %v1723, %v1721
    %v1768 = vpack.c.b16 %v1724, %v1722
    %v1769 = vpack.c.b16 %v1727, %v1725
    %v1770 = vpack.c.b16 %v1728, %v1726
    %v1771 = vpack.c.b16 %v1731, %v1729
    %v1772 = vpack.c.b16 %v1732, %v1730
    %v1773 = vpack.c.b16 %v1735, %v1733
    %v1774 = vpack.c.b16 %v1736, %v1734
    %v1775 = vpack.c.b16 %v1739, %v1737
    %v1776 = vpack.c.b16 %v1740, %v1738
    %v1777 = vpack.c.b16 %v1743, %v1741
    %v1778 = vpack.c.b16 %v1744, %v1742
    %v1779 = vpack.c.b16 %v1747, %v1745
    %v1780 = vpack.c.b16 %v1748, %v1746
    %1813 = vmatprep.subr.bf16.mxu0 %v1750
    %1814 = vmatpush1.bf16.msra.mxu0 %v1749
    %1815 = vmatprep.subr.bf16.mxu0 %v1752
    %1816 = vmatpush1.bf16.msra.mxu0 %v1751
    %1817 = vmatprep.subr.bf16.mxu0 %v1754
    %1818 = vmatpush1.bf16.msra.mxu0 %v1753
    %1819 = vmatprep.subr.bf16.mxu0 %v1756
    %1820 = vmatpush1.bf16.msra.mxu0 %v1755
    %1821 = vmatprep.subr.bf16.mxu0 %v1758
    %1822 = vmatpush1.bf16.msra.mxu0 %v1757
    %1823 = vmatprep.subr.bf16.mxu0 %v1760
    %1824 = vmatpush1.bf16.msra.mxu0 %v1759
    %1825 = vmatprep.subr.bf16.mxu0 %v1762
    %1826 = vmatpush1.bf16.msra.mxu0 %v1761
    %1827 = vmatprep.subr.bf16.mxu0 %v1764
    %1828 = vmatpush1.bf16.msra.mxu0 %v1763
    %1829 = vmatprep.subr.bf16.mxu0 %v1766
    %1830 = vmatpush1.bf16.msra.mxu0 %v1765
    %1831 = vmatprep.subr.bf16.mxu0 %v1768
    %1832 = vmatpush1.bf16.msra.mxu0 %v1767
    %1833 = vmatprep.subr.bf16.mxu0 %v1770
    %1834 = vmatpush1.bf16.msra.mxu0 %v1769
    %1835 = vmatprep.subr.bf16.mxu0 %v1772
    %1836 = vmatpush1.bf16.msra.mxu0 %v1771
    %1837 = vmatprep.subr.bf16.mxu0 %v1774
    %1838 = vmatpush1.bf16.msra.mxu0 %v1773
    %1839 = vmatprep.subr.bf16.mxu0 %v1776
    %1840 = vmatpush1.bf16.msra.mxu0 %v1775
    %1841 = vmatprep.subr.bf16.mxu0 %v1778
    %1842 = vmatpush1.bf16.msra.mxu0 %v1777
    %1843 = vmatprep.subr.bf16.mxu0 %v1780
    %1844 = vmatpush1.bf16.msra.mxu0 %v1779
    %1845 = vmatprep.mubr.bf16.mxu0 %v1650
    %1846 = vmatmul.mubr.bf16.gmra.mrb[0].mxu0 %v1649
    %v1847 = vpop.f32.mrb[0].mxu0
    %v1848 = vadd.f32 0.0, %v1847
    %v1849 = vpop.f32.mrb[0].mxu0
    %v1850 = vadd.f32 0.0, %v1849
    %v1851 = vpop.f32.mrb[0].mxu0
    %v1852 = vpop.f32.mrb[0].mxu0
    %1853 = vdwg.mxu0
    %v1854 = vadd.f32 %v1589, %v1848
    %v1855 = vadd.f32 %v1591, %v1850
    %v1856 = vld [vmem:[#allocation4 + $0x618] sm:$0xff]
    %v1857 = vld [vmem:[#allocation4 + $0x620] sm:$0xff]
    %v1858 = vld [vmem:[#allocation4 + $0x628] sm:$0xff]
    %v1859 = vld [vmem:[#allocation4 + $0x630] sm:$0xff]
    %v1860 = vld [vmem:[#allocation4 + $0x638] sm:$0xff]
    %v1861 = vld [vmem:[#allocation4 + $0x640] sm:$0xff]
    %v1862 = vld [vmem:[#allocation4 + $0x648] sm:$0xff]
    %v1863 = vld [vmem:[#allocation4 + $0x650] sm:$0xff]
    %v1864 = vld [vmem:[#allocation4 + $0x658] sm:$0xff]
    %v1865 = vld [vmem:[#allocation4 + $0x660] sm:$0xff]
    %v1866 = vld [vmem:[#allocation4 + $0x668] sm:$0xff]
    %v1867 = vld [vmem:[#allocation4 + $0x670] sm:$0xff]
    %v1868 = vld [vmem:[#allocation4 + $0x678] sm:$0xff]
    %v1869 = vld [vmem:[#allocation4 + $0x680] sm:$0xff]
    %v1870 = vld [vmem:[#allocation4 + $0x688] sm:$0xff]
    %v1871 = vld [vmem:[#allocation4 + $0x690] sm:$0xff]
    %v1872 = vld [vmem:[#allocation4 + $0x698] sm:$0xff]
    %v1873 = vld [vmem:[#allocation4 + $0x6a0] sm:$0xff]
    %v1874 = vld [vmem:[#allocation4 + $0x6a8] sm:$0xff]
    %v1875 = vld [vmem:[#allocation4 + $0x6b0] sm:$0xff]
    %v1876 = vld [vmem:[#allocation4 + $0x6b8] sm:$0xff]
    %v1877 = vld [vmem:[#allocation4 + $0x6c0] sm:$0xff]
    %v1878 = vld [vmem:[#allocation4 + $0x6c8] sm:$0xff]
    %v1879 = vld [vmem:[#allocation4 + $0x6d0] sm:$0xff]
    %v1880 = vld [vmem:[#allocation4 + $0x6d8] sm:$0xff]
    %v1881 = vld [vmem:[#allocation4 + $0x6e0] sm:$0xff]
    %v1882 = vld [vmem:[#allocation4 + $0x6e8] sm:$0xff]
    %v1883 = vld [vmem:[#allocation4 + $0x6f0] sm:$0xff]
    %v1884 = vld [vmem:[#allocation4 + $0x6f8] sm:$0xff]
    %v1885 = vld [vmem:[#allocation4 + $0x700] sm:$0xff]
    %v1886 = vld [vmem:[#allocation4 + $0x708] sm:$0xff]
    %v1887 = vld [vmem:[#allocation4 + $0x710] sm:$0xff]
    %v1888 = vrot.slane %v1639, 3
    %v1889 = vrot.slane %v1641, 2
    %v1890 = vsel %vm1177, %v1889, %v1888
    %v1891 = vrot.slane %v1640, 3
    %v1892 = vrot.slane %v1642, 2
    %v1893 = vsel %vm1177, %v1892, %v1891
    %v1894 = vpack.c.b16 %v1890, %v1890
    %v1895 = vpack.c.b16 %v1893, %v1893
    %v1930 = vunpack.c.l.b16 %v1856
    %v1931 = vunpack.c.h.b16 %v1856
    %v1932 = vunpack.c.l.b16 %v1857
    %v1933 = vunpack.c.h.b16 %v1857
    %v1934 = vunpack.c.l.b16 %v1858
    %v1935 = vunpack.c.h.b16 %v1858
    %v1936 = vunpack.c.l.b16 %v1859
    %v1937 = vunpack.c.h.b16 %v1859
    %v1938 = vunpack.c.l.b16 %v1860
    %v1939 = vunpack.c.h.b16 %v1860
    %v1940 = vunpack.c.l.b16 %v1861
    %v1941 = vunpack.c.h.b16 %v1861
    %v1942 = vunpack.c.l.b16 %v1862
    %v1943 = vunpack.c.h.b16 %v1862
    %v1944 = vunpack.c.l.b16 %v1863
    %v1945 = vunpack.c.h.b16 %v1863
    %v1946 = vunpack.c.l.b16 %v1864
    %v1947 = vunpack.c.h.b16 %v1864
    %v1948 = vunpack.c.l.b16 %v1865
    %v1949 = vunpack.c.h.b16 %v1865
    %v1950 = vunpack.c.l.b16 %v1866
    %v1951 = vunpack.c.h.b16 %v1866
    %v1952 = vunpack.c.l.b16 %v1867
    %v1953 = vunpack.c.h.b16 %v1867
    %v1954 = vunpack.c.l.b16 %v1868
    %v1955 = vunpack.c.h.b16 %v1868
    %v1956 = vunpack.c.l.b16 %v1869
    %v1957 = vunpack.c.h.b16 %v1869
    %v1958 = vunpack.c.l.b16 %v1870
    %v1959 = vunpack.c.h.b16 %v1870
    %v1960 = vunpack.c.l.b16 %v1871
    %v1961 = vunpack.c.h.b16 %v1871
    %v1962 = vunpack.c.l.b16 %v1872
    %v1963 = vunpack.c.h.b16 %v1872
    %v1964 = vunpack.c.l.b16 %v1873
    %v1965 = vunpack.c.h.b16 %v1873
    %v1966 = vunpack.c.l.b16 %v1874
    %v1967 = vunpack.c.h.b16 %v1874
    %v1968 = vunpack.c.l.b16 %v1875
    %v1969 = vunpack.c.h.b16 %v1875
    %v1970 = vunpack.c.l.b16 %v1876
    %v1971 = vunpack.c.h.b16 %v1876
    %v1972 = vunpack.c.l.b16 %v1877
    %v1973 = vunpack.c.h.b16 %v1877
    %v1974 = vunpack.c.l.b16 %v1878
    %v1975 = vunpack.c.h.b16 %v1878
    %v1976 = vunpack.c.l.b16 %v1879
    %v1977 = vunpack.c.h.b16 %v1879
    %v1978 = vunpack.c.l.b16 %v1880
    %v1979 = vunpack.c.h.b16 %v1880
    %v1980 = vunpack.c.l.b16 %v1881
    %v1981 = vunpack.c.h.b16 %v1881
    %v1982 = vunpack.c.l.b16 %v1882
    %v1983 = vunpack.c.h.b16 %v1882
    %v1984 = vunpack.c.l.b16 %v1883
    %v1985 = vunpack.c.h.b16 %v1883
    %v1986 = vunpack.c.l.b16 %v1884
    %v1987 = vunpack.c.h.b16 %v1884
    %v1988 = vunpack.c.l.b16 %v1885
    %v1989 = vunpack.c.h.b16 %v1885
    %v1990 = vunpack.c.l.b16 %v1886
    %v1991 = vunpack.c.h.b16 %v1886
    %v1992 = vunpack.c.l.b16 %v1887
    %v1993 = vunpack.c.h.b16 %v1887
    %v1994 = vpack.c.b16 %v1932, %v1930
    %v1995 = vpack.c.b16 %v1933, %v1931
    %v1996 = vpack.c.b16 %v1936, %v1934
    %v1997 = vpack.c.b16 %v1937, %v1935
    %v1998 = vpack.c.b16 %v1940, %v1938
    %v1999 = vpack.c.b16 %v1941, %v1939
    %v2000 = vpack.c.b16 %v1944, %v1942
    %v2001 = vpack.c.b16 %v1945, %v1943
    %v2002 = vpack.c.b16 %v1948, %v1946
    %v2003 = vpack.c.b16 %v1949, %v1947
    %v2004 = vpack.c.b16 %v1952, %v1950
    %v2005 = vpack.c.b16 %v1953, %v1951
    %v2006 = vpack.c.b16 %v1956, %v1954
    %v2007 = vpack.c.b16 %v1957, %v1955
    %v2008 = vpack.c.b16 %v1960, %v1958
    %v2009 = vpack.c.b16 %v1961, %v1959
    %v2010 = vpack.c.b16 %v1964, %v1962
    %v2011 = vpack.c.b16 %v1965, %v1963
    %v2012 = vpack.c.b16 %v1968, %v1966
    %v2013 = vpack.c.b16 %v1969, %v1967
    %v2014 = vpack.c.b16 %v1972, %v1970
    %v2015 = vpack.c.b16 %v1973, %v1971
    %v2016 = vpack.c.b16 %v1976, %v1974
    %v2017 = vpack.c.b16 %v1977, %v1975
    %v2018 = vpack.c.b16 %v1980, %v1978
    %v2019 = vpack.c.b16 %v1981, %v1979
    %v2020 = vpack.c.b16 %v1984, %v1982
    %v2021 = vpack.c.b16 %v1985, %v1983
    %v2022 = vpack.c.b16 %v1988, %v1986
    %v2023 = vpack.c.b16 %v1989, %v1987
    %v2024 = vpack.c.b16 %v1992, %v1990
    %v2025 = vpack.c.b16 %v1993, %v1991
    %2058 = vmatprep.subr.bf16.mxu0 %v1995
    %2059 = vmatpush1.bf16.msra.mxu0 %v1994
    %2060 = vmatprep.subr.bf16.mxu0 %v1997
    %2061 = vmatpush1.bf16.msra.mxu0 %v1996
    %2062 = vmatprep.subr.bf16.mxu0 %v1999
    %2063 = vmatpush1.bf16.msra.mxu0 %v1998
    %2064 = vmatprep.subr.bf16.mxu0 %v2001
    %2065 = vmatpush1.bf16.msra.mxu0 %v2000
    %2066 = vmatprep.subr.bf16.mxu0 %v2003
    %2067 = vmatpush1.bf16.msra.mxu0 %v2002
    %2068 = vmatprep.subr.bf16.mxu0 %v2005
    %2069 = vmatpush1.bf16.msra.mxu0 %v2004
    %2070 = vmatprep.subr.bf16.mxu0 %v2007
    %2071 = vmatpush1.bf16.msra.mxu0 %v2006
    %2072 = vmatprep.subr.bf16.mxu0 %v2009
    %2073 = vmatpush1.bf16.msra.mxu0 %v2008
    %2074 = vmatprep.subr.bf16.mxu0 %v2011
    %2075 = vmatpush1.bf16.msra.mxu0 %v2010
    %2076 = vmatprep.subr.bf16.mxu0 %v2013
    %2077 = vmatpush1.bf16.msra.mxu0 %v2012
    %2078 = vmatprep.subr.bf16.mxu0 %v2015
    %2079 = vmatpush1.bf16.msra.mxu0 %v2014
    %2080 = vmatprep.subr.bf16.mxu0 %v2017
    %2081 = vmatpush1.bf16.msra.mxu0 %v2016
    %2082 = vmatprep.subr.bf16.mxu0 %v2019
    %2083 = vmatpush1.bf16.msra.mxu0 %v2018
    %2084 = vmatprep.subr.bf16.mxu0 %v2021
    %2085 = vmatpush1.bf16.msra.mxu0 %v2020
    %2086 = vmatprep.subr.bf16.mxu0 %v2023
    %2087 = vmatpush1.bf16.msra.mxu0 %v2022
    %2088 = vmatprep.subr.bf16.mxu0 %v2025
    %2089 = vmatpush1.bf16.msra.mxu0 %v2024
    %2090 = vmatprep.mubr.bf16.mxu0 %v1895
    %2091 = vmatmul.mubr.bf16.gmra.mrb[0].mxu0 %v1894
    %v2092 = vpop.f32.mrb[0].mxu0
    %v2093 = vadd.f32 0.0, %v2092
    %v2094 = vpop.f32.mrb[0].mxu0
    %v2095 = vadd.f32 0.0, %v2094
    %v2096 = vpop.f32.mrb[0].mxu0
    %v2097 = vpop.f32.mrb[0].mxu0
    %2098 = vdwg.mxu0
    %v2099 = vadd.f32 %v1854, %v2093
    %v2100 = vadd.f32 %v1855, %v2095
    %v2102 = vlaneseq
    %v2103 = vshrl.u32 %v2102, 7
    %v2104 = vsub.s32 0, %v2103
    %v2105 = vrot.slane %v45, %v2104
    %v2106 = vlaneseq
    %v2107 = vshrl.u32 %v2106, 7
    %v2108 = vsub.s32 1, %v2107
    %v2109 = vrot.slane %v45, %v2108
    %v2112 = vadd.f32 %v2099, %v2105
    %v2113 = vadd.f32 %v2100, %v2109
    %v2114 = vmax.f32 %v2112, 0.0
    %v2115 = vmax.f32 %v2113, 0.0
    %v2116 = vpack.c.bf16 %v2114, %v2114
    %v2117 = vpack.c.bf16 %v2115, %v2115
    %v2118 = vld [vmem:[#allocation4 + $0x718] sm:$0xff]
    %v2119 = vld [vmem:[#allocation4 + $0x720] sm:$0xff]
    %v2120 = vld [vmem:[#allocation4 + $0x728] sm:$0xff]
    %v2121 = vld [vmem:[#allocation4 + $0x730] sm:$0xff]
    %v2122 = vld [vmem:[#allocation4 + $0x738] sm:$0xff]
    %v2123 = vld [vmem:[#allocation4 + $0x740] sm:$0xff]
    %v2124 = vld [vmem:[#allocation4 + $0x748] sm:$0xff]
    %v2125 = vld [vmem:[#allocation4 + $0x750] sm:$0xff]
    %v2126 = vld [vmem:[#allocation4 + $0x758] sm:$0xff]
    %v2127 = vld [vmem:[#allocation4 + $0x760] sm:$0xff]
    %v2128 = vld [vmem:[#allocation4 + $0x768] sm:$0xff]
    %v2129 = vld [vmem:[#allocation4 + $0x770] sm:$0xff]
    %v2130 = vld [vmem:[#allocation4 + $0x778] sm:$0xff]
    %v2131 = vld [vmem:[#allocation4 + $0x780] sm:$0xff]
    %v2132 = vld [vmem:[#allocation4 + $0x788] sm:$0xff]
    %v2133 = vld [vmem:[#allocation4 + $0x790] sm:$0xff]
    %v2134 = vld [vmem:[#allocation4 + $0x798] sm:$0xff]
    %v2135 = vld [vmem:[#allocation4 + $0x7a0] sm:$0xff]
    %v2136 = vld [vmem:[#allocation4 + $0x7a8] sm:$0xff]
    %v2137 = vld [vmem:[#allocation4 + $0x7b0] sm:$0xff]
    %v2138 = vld [vmem:[#allocation4 + $0x7b8] sm:$0xff]
    %v2139 = vld [vmem:[#allocation4 + $0x7c0] sm:$0xff]
    %v2140 = vld [vmem:[#allocation4 + $0x7c8] sm:$0xff]
    %v2141 = vld [vmem:[#allocation4 + $0x7d0] sm:$0xff]
    %v2142 = vld [vmem:[#allocation4 + $0x7d8] sm:$0xff]
    %v2143 = vld [vmem:[#allocation4 + $0x7e0] sm:$0xff]
    %v2144 = vld [vmem:[#allocation4 + $0x7e8] sm:$0xff]
    %v2145 = vld [vmem:[#allocation4 + $0x7f0] sm:$0xff]
    %v2146 = vld [vmem:[#allocation4 + $0x7f8] sm:$0xff]
    %v2147 = vld [vmem:[#allocation4 + $0x800] sm:$0xff]
    %v2148 = vld [vmem:[#allocation4 + $0x808] sm:$0xff]
    %v2149 = vld [vmem:[#allocation4 + $0x810] sm:$0xff]
    %v2151 = vlaneseq
    %v2152 = vshrl.u32 %v2151, 7
    %v2153 = vsub.s32 0, %v2152
    %v2154 = vrot.slane %v47, %v2153
    %v2155 = vlaneseq
    %v2156 = vshrl.u32 %v2155, 7
    %v2157 = vsub.s32 1, %v2156
    %v2158 = vrot.slane %v47, %v2157
    %v2193 = vunpack.c.l.b16 %v2118
    %v2194 = vunpack.c.h.b16 %v2118
    %v2195 = vunpack.c.l.b16 %v2119
    %v2196 = vunpack.c.h.b16 %v2119
    %v2197 = vunpack.c.l.b16 %v2120
    %v2198 = vunpack.c.h.b16 %v2120
    %v2199 = vunpack.c.l.b16 %v2121
    %v2200 = vunpack.c.h.b16 %v2121
    %v2201 = vunpack.c.l.b16 %v2122
    %v2202 = vunpack.c.h.b16 %v2122
    %v2203 = vunpack.c.l.b16 %v2123
    %v2204 = vunpack.c.h.b16 %v2123
    %v2205 = vunpack.c.l.b16 %v2124
    %v2206 = vunpack.c.h.b16 %v2124
    %v2207 = vunpack.c.l.b16 %v2125
    %v2208 = vunpack.c.h.b16 %v2125
    %v2209 = vunpack.c.l.b16 %v2126
    %v2210 = vunpack.c.h.b16 %v2126
    %v2211 = vunpack.c.l.b16 %v2127
    %v2212 = vunpack.c.h.b16 %v2127
    %v2213 = vunpack.c.l.b16 %v2128
    %v2214 = vunpack.c.h.b16 %v2128
    %v2215 = vunpack.c.l.b16 %v2129
    %v2216 = vunpack.c.h.b16 %v2129
    %v2217 = vunpack.c.l.b16 %v2130
    %v2218 = vunpack.c.h.b16 %v2130
    %v2219 = vunpack.c.l.b16 %v2131
    %v2220 = vunpack.c.h.b16 %v2131
    %v2221 = vunpack.c.l.b16 %v2132
    %v2222 = vunpack.c.h.b16 %v2132
    %v2223 = vunpack.c.l.b16 %v2133
    %v2224 = vunpack.c.h.b16 %v2133
    %v2225 = vunpack.c.l.b16 %v2134
    %v2226 = vunpack.c.h.b16 %v2134
    %v2227 = vunpack.c.l.b16 %v2135
    %v2228 = vunpack.c.h.b16 %v2135
    %v2229 = vunpack.c.l.b16 %v2136
    %v2230 = vunpack.c.h.b16 %v2136
    %v2231 = vunpack.c.l.b16 %v2137
    %v2232 = vunpack.c.h.b16 %v2137
    %v2233 = vunpack.c.l.b16 %v2138
    %v2234 = vunpack.c.h.b16 %v2138
    %v2235 = vunpack.c.l.b16 %v2139
    %v2236 = vunpack.c.h.b16 %v2139
    %v2237 = vunpack.c.l.b16 %v2140
    %v2238 = vunpack.c.h.b16 %v2140
    %v2239 = vunpack.c.l.b16 %v2141
    %v2240 = vunpack.c.h.b16 %v2141
    %v2241 = vunpack.c.l.b16 %v2142
    %v2242 = vunpack.c.h.b16 %v2142
    %v2243 = vunpack.c.l.b16 %v2143
    %v2244 = vunpack.c.h.b16 %v2143
    %v2245 = vunpack.c.l.b16 %v2144
    %v2246 = vunpack.c.h.b16 %v2144
    %v2247 = vunpack.c.l.b16 %v2145
    %v2248 = vunpack.c.h.b16 %v2145
    %v2249 = vunpack.c.l.b16 %v2146
    %v2250 = vunpack.c.h.b16 %v2146
    %v2251 = vunpack.c.l.b16 %v2147
    %v2252 = vunpack.c.h.b16 %v2147
    %v2253 = vunpack.c.l.b16 %v2148
    %v2254 = vunpack.c.h.b16 %v2148
    %v2255 = vunpack.c.l.b16 %v2149
    %v2256 = vunpack.c.h.b16 %v2149
    %v2257 = vpack.c.b16 %v2195, %v2193
    %v2258 = vpack.c.b16 %v2196, %v2194
    %v2259 = vpack.c.b16 %v2199, %v2197
    %v2260 = vpack.c.b16 %v2200, %v2198
    %v2261 = vpack.c.b16 %v2203, %v2201
    %v2262 = vpack.c.b16 %v2204, %v2202
    %v2263 = vpack.c.b16 %v2207, %v2205
    %v2264 = vpack.c.b16 %v2208, %v2206
    %v2265 = vpack.c.b16 %v2211, %v2209
    %v2266 = vpack.c.b16 %v2212, %v2210
    %v2267 = vpack.c.b16 %v2215, %v2213
    %v2268 = vpack.c.b16 %v2216, %v2214
    %v2269 = vpack.c.b16 %v2219, %v2217
    %v2270 = vpack.c.b16 %v2220, %v2218
    %v2271 = vpack.c.b16 %v2223, %v2221
    %v2272 = vpack.c.b16 %v2224, %v2222
    %v2273 = vpack.c.b16 %v2227, %v2225
    %v2274 = vpack.c.b16 %v2228, %v2226
    %v2275 = vpack.c.b16 %v2231, %v2229
    %v2276 = vpack.c.b16 %v2232, %v2230
    %v2277 = vpack.c.b16 %v2235, %v2233
    %v2278 = vpack.c.b16 %v2236, %v2234
    %v2279 = vpack.c.b16 %v2239, %v2237
    %v2280 = vpack.c.b16 %v2240, %v2238
    %v2281 = vpack.c.b16 %v2243, %v2241
    %v2282 = vpack.c.b16 %v2244, %v2242
    %v2283 = vpack.c.b16 %v2247, %v2245
    %v2284 = vpack.c.b16 %v2248, %v2246
    %v2285 = vpack.c.b16 %v2251, %v2249
    %v2286 = vpack.c.b16 %v2252, %v2250
    %v2287 = vpack.c.b16 %v2255, %v2253
    %v2288 = vpack.c.b16 %v2256, %v2254
    %2321 = vmatprep.subr.bf16.mxu0 %v2258
    %2322 = vmatpush1.bf16.msra.mxu0 %v2257
    %2323 = vmatprep.subr.bf16.mxu0 %v2260
    %2324 = vmatpush1.bf16.msra.mxu0 %v2259
    %2325 = vmatprep.subr.bf16.mxu0 %v2262
    %2326 = vmatpush1.bf16.msra.mxu0 %v2261
    %2327 = vmatprep.subr.bf16.mxu0 %v2264
    %2328 = vmatpush1.bf16.msra.mxu0 %v2263
    %2329 = vmatprep.subr.bf16.mxu0 %v2266
    %2330 = vmatpush1.bf16.msra.mxu0 %v2265
    %2331 = vmatprep.subr.bf16.mxu0 %v2268
    %2332 = vmatpush1.bf16.msra.mxu0 %v2267
    %2333 = vmatprep.subr.bf16.mxu0 %v2270
    %2334 = vmatpush1.bf16.msra.mxu0 %v2269
    %2335 = vmatprep.subr.bf16.mxu0 %v2272
    %2336 = vmatpush1.bf16.msra.mxu0 %v2271
    %2337 = vmatprep.subr.bf16.mxu0 %v2274
    %2338 = vmatpush1.bf16.msra.mxu0 %v2273
    %2339 = vmatprep.subr.bf16.mxu0 %v2276
    %2340 = vmatpush1.bf16.msra.mxu0 %v2275
    %2341 = vmatprep.subr.bf16.mxu0 %v2278
    %2342 = vmatpush1.bf16.msra.mxu0 %v2277
    %2343 = vmatprep.subr.bf16.mxu0 %v2280
    %2344 = vmatpush1.bf16.msra.mxu0 %v2279
    %2345 = vmatprep.subr.bf16.mxu0 %v2282
    %2346 = vmatpush1.bf16.msra.mxu0 %v2281
    %2347 = vmatprep.subr.bf16.mxu0 %v2284
    %2348 = vmatpush1.bf16.msra.mxu0 %v2283
    %2349 = vmatprep.subr.bf16.mxu0 %v2286
    %2350 = vmatpush1.bf16.msra.mxu0 %v2285
    %2351 = vmatprep.subr.bf16.mxu0 %v2288
    %2352 = vmatpush1.bf16.msra.mxu0 %v2287
    %2353 = vmatprep.mubr.bf16.mxu0 %v2117
    %2354 = vmatmul.mubr.bf16.gmra.mrb[0].mxu0 %v2116
    %v2355 = vpop.f32.mrb[0].mxu0
    %v2356 = vadd.f32 %v2154, %v2355
    %v2357 = vpop.f32.mrb[0].mxu0
    %v2358 = vadd.f32 %v2158, %v2357
    %v2359 = vpop.f32.mrb[0].mxu0
    %v2360 = vpop.f32.mrb[0].mxu0
    %2361 = vdwg.mxu0
    %v2364 = vcombine.low %v2356, %v2358
    %v2366 = vunpack.c.l.s4 1983009808
    %v2367 = vunpack.c.0.s8 %v2366
    %v2368 = vlaneseq
    %v2369 = vshrl.u32 %v2368, 7
    %v2370 = vsub.s32 %v2367, %v2369
    %v2371 = vrot.slane %v2364, %v2370
    %2373 = vst [vmem:[%s3] sm:$0xf] %v2371
    // Predicated region
    $region22: #{cnn_classifier_forward.1} parent=1 // pred_check
      _
    $region23: #{cnn_classifier_forward.1} parent=1 // pred_check_branch
      %2375 = sbr.rel (0) target = $region25
    $region24: #{cnn_classifier_forward.1} parent=1 // pred_region
      _
    $region25: #{cnn_classifier_forward.1} parent=1 // pred_fallthru
      _
    // Predicated region
    $region26: #{cnn_classifier_forward.1} parent=1 // pred_check
      _
    $region27: #{cnn_classifier_forward.1} parent=1 // pred_check_branch
      %2377 = sbr.rel (0) target = $region29
    $region28: #{cnn_classifier_forward.1} parent=1 // pred_region
      _
    $region29: #{cnn_classifier_forward.1} parent=1 // pred_fallthru
      _
    %2378 = vsyncpa [#allocation5], 1
    %2379 = vsyncpa [#allocation7], 1

</llo_original>
